<compile_context>
chip_gen: v6e
topology: v6e:2x2x1
jax: 0.10.0
libtpu: 0.0.40
codegen_flags: <defaults>
</compile_context>

<pallas_src>
import jax
import jax.numpy as jnp
from jax.experimental import pallas as pl
from jax.experimental.pallas import tpu as pltpu

HID = 128  # hidden width used everywhere in the module


# --------------------------------------------------------------------------
# Pallas kernel: T sequential critic steps. grid=(T,).
#   x_ref   : (1, 256)  bf16  per-step [x1 pad->128 | x_hist pad->128]
#   s0_ref  : (1, 256)  f32   initial [hx | cx]               (VMEM-resident)
#   wa_ref  : (128, 384) bf16 [W1 pad | W1_rec pad | W3]      (VMEM-resident)
#   wb_ref  : (256, 640) bf16 [W_ih;W_hh (512) | W2 (128)]    (VMEM-resident)
#   b_ref   : (1, 1280) f32   [b1|b1r|b_ih+b_hh|b2|b3|w4_row|b4_bcast]
#   q_ref   : (1, 128)  f32   per-step Q broadcast across lanes (lane-dense store)
#   s_ref   : (1, 256)  f32   carried [hx | cx] (constant-index output block)
# --------------------------------------------------------------------------
def critic_rollout_kernel(x_ref, s0_ref, wa_ref, wb_ref, b_ref, q_ref, s_ref):
    f32 = jnp.float32
    bf16 = jnp.bfloat16
    t = pl.program_id(0)

    # initialize the carried recurrent state on the first step
    @pl.when(t == 0)
    def _():
        s_ref[...] = s0_ref[...]

    hx = s_ref[:, 0:HID]
    cx = s_ref[:, HID:2 * HID]

    # ---- per-step packed activations (bf16) --------------------------------
    x1 = x_ref[:, 0:HID]            # cat(x_dyn_par, x_state, x_act_cur), zero-padded
    xh = x_ref[:, HID:2 * HID]      # x_hist, zero-padded

    # ---- unpack resident weight slabs ---------------------------------------
    w1 = wa_ref[:, 0:HID]
    w1r = wa_ref[:, HID:2 * HID]
    w3 = wa_ref[:, 2 * HID:3 * HID]
    w_lstm = wb_ref[:, 0:4 * HID]   # [W_ih; W_hh] stacked on rows (256, 512)
    w2 = wb_ref[:, 4 * HID:5 * HID]

    b1 = b_ref[:, 0:HID]
    b1r = b_ref[:, HID:2 * HID]
    b_lstm = b_ref[:, 2 * HID:6 * HID]          # b_ih + b_hh pre-added
    b2 = b_ref[:, 6 * HID:7 * HID]
    b3 = b_ref[:, 7 * HID:8 * HID]
    w4_row = b_ref[:, 8 * HID:9 * HID]          # fc4 weights as a (1,128) row, f32
    b4_row = b_ref[:, 9 * HID:10 * HID]         # fc4 bias broadcast to all lanes

    # ---- fc1 / fc1_rec (bf16 matmul, f32 accumulate, f32 elementwise) -------
    x_out1 = jnp.maximum(jnp.dot(x1, w1, preferred_element_type=f32) + b1, 0.0)
    x_out2 = jnp.maximum(jnp.dot(xh, w1r, preferred_element_type=f32) + b1r, 0.0)

    # ---- LSTMCell(128, 128): fused (1,256)@(256,512) gate matmul ------------
    lstm_in = jnp.concatenate([x_out2, hx], axis=-1).astype(bf16)
    gates = jnp.dot(lstm_in, w_lstm, preferred_element_type=f32) + b_lstm
    i_g = jax.nn.sigmoid(gates[:, 0 * HID:1 * HID])
    f_g = jax.nn.sigmoid(gates[:, 1 * HID:2 * HID])
    g_g = jnp.tanh(gates[:, 2 * HID:3 * HID])
    o_g = jax.nn.sigmoid(gates[:, 3 * HID:4 * HID])
    cx_new = f_g * cx + i_g * g_g
    hx_new = o_g * jnp.tanh(cx_new)

    # ---- fc2 on cat(x_out1, hx_new): fused (1,256)@(256,128) ----------------
    fc2_in = jnp.concatenate([x_out1, hx_new], axis=-1).astype(bf16)
    x_out3 = jnp.maximum(jnp.dot(fc2_in, w2, preferred_element_type=f32) + b2, 0.0)

    # ---- fc3 -----------------------------------------------------------------
    x_out4 = jnp.maximum(
        jnp.dot(x_out3.astype(bf16), w3, preferred_element_type=f32) + b3, 0.0)

    # ---- fc4 as VPU multiply + lane reduction (no padded MXU matmul) ---------
    q = jnp.sum(x_out4 * w4_row, axis=-1, keepdims=True)          # (1, 1) f32
    q_ref[...] = jnp.broadcast_to(q, (1, HID)) + b4_row           # lane-dense store

    # ---- carry recurrent state (f32) -----------------------------------------
    s_ref[:, 0:HID] = hx_new
    s_ref[:, HID:2 * HID] = cx_new


# --------------------------------------------------------------------------
# Wrapper: pack the whole rollout's activations once, run the in-kernel loop.
# --------------------------------------------------------------------------
def critic_rollout(packed, x_dyn_par, x_hist, x_state, x_act_cur, hx0, cx0):
    T = x_dyn_par.shape[0]
    x1 = jnp.concatenate([x_dyn_par, x_state, x_act_cur], axis=-1)
    d_in1 = x1.shape[-1]
    d_in2 = x_hist.shape[-1]
    assert d_in1 <= HID and d_in2 <= HID, "input feature dims must fit one 128-lane tile"

    x1p = jnp.zeros((T, HID), jnp.float32).at[:, :d_in1].set(x1)
    xhp = jnp.zeros((T, HID), jnp.float32).at[:, :d_in2].set(x_hist)
    x_slab = (jnp.concatenate([x1p, xhp], axis=-1)
              .astype(jnp.bfloat16).reshape(T, 1, 2 * HID))
    state0 = jnp.concatenate([hx0, cx0], axis=-1).astype(jnp.float32)   # (1, 256)

    flops_per_step = 2 * (3 * HID * HID + 2 * HID * 4 * HID + 2 * HID * HID) + 2 * HID
    cost = pl.CostEstimate(
        flops=T * flops_per_step,
        transcendentals=T * 5 * HID,
        bytes_accessed=(packed["wa"].size * 2 + packed["wb"].size * 2
                        + packed["bias"].size * 4
                        + x_slab.size * 2 + T * HID * 4 + 4 * 2 * HID * 4),
    )

    q_slab, state_out = pl.pallas_call(
        critic_rollout_kernel,
        out_shape=(jax.ShapeDtypeStruct((T, 1, HID), jnp.float32),
                   jax.ShapeDtypeStruct((1, 2 * HID), jnp.float32)),
        grid_spec=pltpu.PrefetchScalarGridSpec(
            num_scalar_prefetch=0,
            grid=(T,),
            in_specs=[
                pl.BlockSpec((None, 1, 2 * HID), lambda t: (t, 0, 0)),   # per-step x
                pl.BlockSpec((1, 2 * HID), lambda t: (0, 0)),            # initial state
                pl.BlockSpec((HID, 3 * HID), lambda t: (0, 0)),          # wa (resident)
                pl.BlockSpec((2 * HID, 5 * HID), lambda t: (0, 0)),      # wb (resident)
                pl.BlockSpec((1, 10 * HID), lambda t: (0, 0)),           # bias (resident)
            ],
            out_specs=[
                pl.BlockSpec((None, 1, HID), lambda t: (t, 0, 0)),       # per-step Q
                pl.BlockSpec((1, 2 * HID), lambda t: (0, 0)),            # carried state
            ],
        ),
        compiler_params=pltpu.CompilerParams(dimension_semantics=("arbitrary",)),
        cost_estimate=cost,
    )(x_slab, state0, packed["wa"], packed["wb"], packed["bias"])

    q = q_slab[:, 0, 0:1]                     # (T, 1) Q value per step
    hx_new = state_out[:, 0:HID]
    cx_new = state_out[:, HID:2 * HID]
    return q, hx_new, cx_new


# --------------------------------------------------------------------------
# Deterministic parameter init (matching shapes / init styles of the module).
# --------------------------------------------------------------------------
def xavier_uniform(key, fan_in, fan_out):
    bound = jnp.sqrt(6.0 / (fan_in + fan_out))
    return jax.random.uniform(key, (fan_in, fan_out), jnp.float32, -bound, bound)


def default_uniform(key, shape, fan_in):
    bound = 1.0 / jnp.sqrt(jnp.float32(fan_in))
    return jax.random.uniform(key, shape, jnp.float32, -bound, bound)


def init_params(key, dim_dyn_par, dim_actions, dim_states):
    d_in1 = dim_dyn_par + dim_states + dim_actions
    d_in2 = dim_states + dim_actions
    ks = jax.random.split(key, 16)
    p = {}
    p["w1"] = xavier_uniform(ks[0], d_in1, HID)
    p["b1"] = default_uniform(ks[1], (1, HID), d_in1)
    p["w1r"] = xavier_uniform(ks[2], d_in2, HID)
    p["b1r"] = default_uniform(ks[3], (1, HID), d_in2)
    p["w_ih"] = default_uniform(ks[4], (HID, 4 * HID), HID)
    p["b_ih"] = default_uniform(ks[5], (1, 4 * HID), HID)
    p["w_hh"] = default_uniform(ks[6], (HID, 4 * HID), HID)
    p["b_hh"] = default_uniform(ks[7], (1, 4 * HID), HID)
    p["w2"] = xavier_uniform(ks[8], 2 * HID, HID)
    p["b2"] = default_uniform(ks[9], (1, HID), 2 * HID)
    p["w3"] = xavier_uniform(ks[10], HID, HID)
    p["b3"] = default_uniform(ks[11], (1, HID), HID)
    p["w4"] = xavier_uniform(ks[12], HID, 1)
    p["b4"] = default_uniform(ks[13], (1, 1), HID)
    return p


def pack_params(p):
    """Pack weights/biases into 3 lane-aligned slabs (once, offline). Weights -> bf16."""
    d_in1 = p["w1"].shape[0]
    d_in2 = p["w1r"].shape[0]
    assert d_in1 <= HID and d_in2 <= HID, "input feature dims must fit one 128-lane tile"

    w1_pad = jnp.zeros((HID, HID), jnp.float32).at[:d_in1, :].set(p["w1"])
    w1r_pad = jnp.zeros((HID, HID), jnp.float32).at[:d_in2, :].set(p["w1r"])
    wa = jnp.concatenate([w1_pad, w1r_pad, p["w3"]], axis=1).astype(jnp.bfloat16)

    w_lstm = jnp.concatenate([p["w_ih"], p["w_hh"]], axis=0)                 # (256, 512)
    wb = jnp.concatenate([w_lstm, p["w2"]], axis=1).astype(jnp.bfloat16)     # (256, 640)

    b_lstm = p["b_ih"] + p["b_hh"]                                           # (1, 512)
    w4_row = p["w4"].reshape(1, HID)                                         # (1, 128)
    b4_row = jnp.broadcast_to(p["b4"], (1, HID))
    bias = jnp.concatenate(
        [p["b1"], p["b1r"], b_lstm, p["b2"], p["b3"], w4_row, b4_row],
        axis=1).astype(jnp.float32)                                          # (1, 1280)
    return {"wa": wa, "wb": wb, "bias": bias}


# --------------------------------------------------------------------------
# Pure-JAX reference (mirrors the kernel's bf16 matmul / f32 accumulate numerics).
# --------------------------------------------------------------------------
def critic_reference_step(p, x_dyn, x_hist, x_state, x_act, hx, cx):
    f32 = jnp.float32
    bf = lambda a: a.astype(jnp.bfloat16)
    bdot = lambda a, w: jnp.dot(bf(a), bf(w), preferred_element_type=f32)

    x1 = jnp.concatenate([x_dyn, x_state, x_act], axis=-1)
    x_out1 = jax.nn.relu(bdot(x1, p["w1"]) + p["b1"])
    x_out2 = jax.nn.relu(bdot(x_hist, p["w1r"]) + p["b1r"])
    w_lstm = jnp.concatenate([p["w_ih"], p["w_hh"]], axis=0)
    gates = bdot(jnp.concatenate([x_out2, hx], axis=-1), w_lstm) + (p["b_ih"] + p["b_hh"])
    i_g = jax.nn.sigmoid(gates[:, 0 * HID:1 * HID])
    f_g = jax.nn.sigmoid(gates[:, 1 * HID:2 * HID])
    g_g = jnp.tanh(gates[:, 2 * HID:3 * HID])
    o_g = jax.nn.sigmoid(gates[:, 3 * HID:4 * HID])
    cx_new = f_g * cx + i_g * g_g
    hx_new = o_g * jnp.tanh(cx_new)
    x_out3 = jax.nn.relu(bdot(jnp.concatenate([x_out1, hx_new], axis=-1), p["w2"]) + p["b2"])
    x_out4 = jax.nn.relu(bdot(x_out3, p["w3"]) + p["b3"])
    q = x_out4 @ p["w4"] + p["b4"]
    return q, hx_new, cx_new


if __name__ == "__main__":
    dim_dyn_par, dim_actions, dim_states = 4, 3, 6
    d_in2 = dim_states + dim_actions
    T = 8  # rollout length handled inside one kernel call

    key = jax.random.PRNGKey(0)
    k_par, k_dyn, k_hist, k_state, k_act = jax.random.split(key, 5)

    params = init_params(k_par, dim_dyn_par, dim_actions, dim_states)
    packed = pack_params(params)

    x_dyn_par = jax.random.normal(k_dyn, (T, dim_dyn_par), jnp.float32)
    x_hist = jax.random.normal(k_hist, (T, d_in2), jnp.float32)
    x_state = jax.random.normal(k_state, (T, dim_states), jnp.float32)
    x_act_cur = jax.random.normal(k_act, (T, dim_actions), jnp.float32)
    hx0 = jnp.zeros((1, HID), jnp.float32)
    cx0 = jnp.zeros((1, HID), jnp.float32)

    fwd = jax.jit(critic_rollout)
    q_all, hx_new, cx_new = fwd(packed, x_dyn_par, x_hist, x_state, x_act_cur, hx0, cx0)
    jax.block_until_ready((q_all, hx_new, cx_new))

    # step-by-step reference (matches the module's per-call forward semantics)
    ref_qs = []
    hx_r, cx_r = hx0, cx0
    for t in range(T):
        q_r, hx_r, cx_r = critic_reference_step(
            params, x_dyn_par[t:t + 1], x_hist[t:t + 1],
            x_state[t:t + 1], x_act_cur[t:t + 1], hx_r, cx_r)
        ref_qs.append(q_r[0])
    ref_q = jnp.stack(ref_qs, axis=0)

    assert jnp.allclose(q_all, ref_q, atol=1e-3, rtol=1e-3)
    assert jnp.allclose(hx_new, hx_r, atol=1e-3, rtol=1e-3)
    assert jnp.allclose(cx_new, cx_r, atol=1e-3, rtol=1e-3)

    print("KERNEL_OK")
</pallas_src>

<mosaic_0001>
module attributes {stable_mosaic.version = 11 : i64} {
  func.func @critic_rollout_kernel(%arg0: i32, %arg1: memref<1x1x256xbf16, #tpu.memory_space<vmem>>, %arg2: memref<1x256xf32, #tpu.memory_space<vmem>>, %arg3: memref<128x384xbf16, #tpu.memory_space<vmem>>, %arg4: memref<256x640xbf16, #tpu.memory_space<vmem>>, %arg5: memref<1x1280xf32, #tpu.memory_space<vmem>>, %arg6: memref<1x1x128xf32, #tpu.memory_space<vmem>>, %arg7: memref<1x256xf32, #tpu.memory_space<vmem>>) attributes {dimension_semantics = [#tpu.dimension_semantics<arbitrary>], iteration_bounds = array<i64: 8>, scalar_prefetch = 0 : i64, scratch_operands = 0 : i64, tpu.core_type = #tpu.core_type<tc>, window_params = [{transform_indices = @transform_0, window_bounds = array<i64: 1, 1, 256>}, {pipeline_mode = #tpu.pipeline_mode<synchronous>, transform_indices = @transform_1, window_bounds = array<i64: 1, 256>}, {pipeline_mode = #tpu.pipeline_mode<synchronous>, transform_indices = @transform_2, window_bounds = array<i64: 128, 384>}, {pipeline_mode = #tpu.pipeline_mode<synchronous>, transform_indices = @transform_3, window_bounds = array<i64: 256, 640>}, {pipeline_mode = #tpu.pipeline_mode<synchronous>, transform_indices = @transform_4, window_bounds = array<i64: 1, 1280>}, {transform_indices = @transform_5, window_bounds = array<i64: 1, 1, 128>}, {pipeline_mode = #tpu.pipeline_mode<synchronous>, transform_indices = @transform_6, window_bounds = array<i64: 1, 256>}]} {
    %c0_i32 = arith.constant 0 : i32
    %0 = arith.cmpi eq, %arg0, %c0_i32 : i32
    %1 = arith.extui %0 : i1 to i32
    %c0_i32_0 = arith.constant 0 : i32
    %2 = arith.cmpi ne, %1, %c0_i32_0 : i32
    scf.if %2 {
      %c0_46 = arith.constant 0 : index
      %c0_47 = arith.constant 0 : index
      %80 = vector.load %arg2[%c0_46, %c0_47] : memref<1x256xf32, #tpu.memory_space<vmem>>, vector<1x256xf32>
      %c0_48 = arith.constant 0 : index
      %c0_49 = arith.constant 0 : index
      %81 = vector.load %arg7[%c0_48, %c0_49] : memref<1x256xf32, #tpu.memory_space<vmem>>, vector<1x256xf32>
      tpu.vector_store %arg7[%c0_48, %c0_49], %80 {strides = array<i32>} : memref<1x256xf32, #tpu.memory_space<vmem>>, vector<1x256xf32>,
    } else {
    }
    %c0 = arith.constant 0 : index
    %c0_1 = arith.constant 0 : index
    %3 = vector.load %arg7[%c0, %c0_1] : memref<1x256xf32, #tpu.memory_space<vmem>>, vector<1x128xf32>
    %c0_2 = arith.constant 0 : index
    %c128 = arith.constant 128 : index
    %4 = vector.load %arg7[%c0_2, %c128] : memref<1x256xf32, #tpu.memory_space<vmem>>, vector<1x128xf32>
    %c0_3 = arith.constant 0 : index
    %c0_4 = arith.constant 0 : index
    %c0_5 = arith.constant 0 : index
    %5 = vector.load %arg1[%c0_3, %c0_4, %c0_5] : memref<1x1x256xbf16, #tpu.memory_space<vmem>>, vector<1x1x128xbf16>
    %6 = vector.shape_cast %5 : vector<1x1x128xbf16> to vector<1x128xbf16>
    %c0_6 = arith.constant 0 : index
    %c0_7 = arith.constant 0 : index
    %c128_8 = arith.constant 128 : index
    %7 = vector.load %arg1[%c0_6, %c0_7, %c128_8] : memref<1x1x256xbf16, #tpu.memory_space<vmem>>, vector<1x1x128xbf16>
    %8 = vector.shape_cast %7 : vector<1x1x128xbf16> to vector<1x128xbf16>
    %c0_9 = arith.constant 0 : index
    %c0_10 = arith.constant 0 : index
    %9 = vector.load %arg3[%c0_9, %c0_10] : memref<128x384xbf16, #tpu.memory_space<vmem>>, vector<128x128xbf16>
    %c0_11 = arith.constant 0 : index
    %c128_12 = arith.constant 128 : index
    %10 = vector.load %arg3[%c0_11, %c128_12] : memref<128x384xbf16, #tpu.memory_space<vmem>>, vector<128x128xbf16>
    %c0_13 = arith.constant 0 : index
    %c256 = arith.constant 256 : index
    %11 = vector.load %arg3[%c0_13, %c256] : memref<128x384xbf16, #tpu.memory_space<vmem>>, vector<128x128xbf16>
    %c0_14 = arith.constant 0 : index
    %c0_15 = arith.constant 0 : index
    %12 = vector.load %arg4[%c0_14, %c0_15] : memref<256x640xbf16, #tpu.memory_space<vmem>>, vector<256x512xbf16>
    %c0_16 = arith.constant 0 : index
    %c512 = arith.constant 512 : index
    %13 = vector.load %arg4[%c0_16, %c512] : memref<256x640xbf16, #tpu.memory_space<vmem>>, vector<256x128xbf16>
    %c0_17 = arith.constant 0 : index
    %c0_18 = arith.constant 0 : index
    %14 = vector.load %arg5[%c0_17, %c0_18] : memref<1x1280xf32, #tpu.memory_space<vmem>>, vector<1x128xf32>
    %c0_19 = arith.constant 0 : index
    %c128_20 = arith.constant 128 : index
    %15 = vector.load %arg5[%c0_19, %c128_20] : memref<1x1280xf32, #tpu.memory_space<vmem>>, vector<1x128xf32>
    %c0_21 = arith.constant 0 : index
    %c256_22 = arith.constant 256 : index
    %16 = vector.load %arg5[%c0_21, %c256_22] : memref<1x1280xf32, #tpu.memory_space<vmem>>, vector<1x512xf32>
    %c0_23 = arith.constant 0 : index
    %c768 = arith.constant 768 : index
    %17 = vector.load %arg5[%c0_23, %c768] : memref<1x1280xf32, #tpu.memory_space<vmem>>, vector<1x128xf32>
    %c0_24 = arith.constant 0 : index
    %c896 = arith.constant 896 : index
    %18 = vector.load %arg5[%c0_24, %c896] : memref<1x1280xf32, #tpu.memory_space<vmem>>, vector<1x128xf32>
    %c0_25 = arith.constant 0 : index
    %c1024 = arith.constant 1024 : index
    %19 = vector.load %arg5[%c0_25, %c1024] : memref<1x1280xf32, #tpu.memory_space<vmem>>, vector<1x128xf32>
    %c0_26 = arith.constant 0 : index
    %c1152 = arith.constant 1152 : index
    %20 = vector.load %arg5[%c0_26, %c1152] : memref<1x1280xf32, #tpu.memory_space<vmem>>, vector<1x128xf32>
    %cst = arith.constant dense<0.000000e+00> : vector<1x128xf32>
    %21 = tpu.matmul %6, %9, %cst {dimension_numbers = #tpu.dot_dimension_numbers<[1], [0], [0], [1], [0, 0, 1, 1], [], []>} : vector<1x128xbf16>, vector<128x128xbf16>, vector<1x128xf32> -> vector<1x128xf32>
    %22 = arith.addf %21, %14 : vector<1x128xf32>
    %cst_27 = arith.constant 0.000000e+00 : f32
    %23 = vector.broadcast %cst_27 : f32 to vector<1x128xf32>
    %24 = arith.maximumf %22, %23 : vector<1x128xf32>
    %cst_28 = arith.constant dense<0.000000e+00> : vector<1x128xf32>
    %25 = tpu.matmul %8, %10, %cst_28 {dimension_numbers = #tpu.dot_dimension_numbers<[1], [0], [0], [1], [0, 0, 1, 1], [], []>} : vector<1x128xbf16>, vector<128x128xbf16>, vector<1x128xf32> -> vector<1x128xf32>
    %26 = arith.addf %25, %15 : vector<1x128xf32>
    %cst_29 = arith.constant 0.000000e+00 : f32
    %27 = vector.broadcast %cst_29 : f32 to vector<1x128xf32>
    %28 = arith.maximumf %26, %27 : vector<1x128xf32>
    %29 = tpu.concatenate %28, %3 in 1 : vector<1x128xf32>, vector<1x128xf32> -> vector<1x256xf32>
    %30 = arith.truncf %29 : vector<1x256xf32> to vector<1x256xbf16>
    %cst_30 = arith.constant dense<0.000000e+00> : vector<1x512xf32>
    %31 = tpu.matmul %30, %12, %cst_30 {dimension_numbers = #tpu.dot_dimension_numbers<[1], [0], [0], [1], [0, 0, 1, 1], [], []>} : vector<1x256xbf16>, vector<256x512xbf16>, vector<1x512xf32> -> vector<1x512xf32>
    %32 = arith.addf %31, %16 : vector<1x512xf32>
    %33 = vector.extract_strided_slice %32 {offsets = [0, 0], sizes = [1, 128], strides = [1, 1]} : vector<1x512xf32> to vector<1x128xf32>
    %34 = arith.negf %33 : vector<1x128xf32>
    %35 = math.exp %34 : vector<1x128xf32>
    %cst_31 = arith.constant 1.000000e+00 : f32
    %36 = vector.broadcast %cst_31 : f32 to vector<1x128xf32>
    %37 = arith.addf %36, %35 : vector<1x128xf32>
    %38 = arith.divf %36, %37 : vector<1x128xf32>
    %39 = vector.extract_strided_slice %32 {offsets = [0, 128], sizes = [1, 128], strides = [1, 1]} : vector<1x512xf32> to vector<1x128xf32>
    %40 = arith.negf %39 : vector<1x128xf32>
    %41 = math.exp %40 : vector<1x128xf32>
    %cst_32 = arith.constant 1.000000e+00 : f32
    %42 = vector.broadcast %cst_32 : f32 to vector<1x128xf32>
    %43 = arith.addf %42, %41 : vector<1x128xf32>
    %44 = arith.divf %42, %43 : vector<1x128xf32>
    %45 = vector.extract_strided_slice %32 {offsets = [0, 256], sizes = [1, 128], strides = [1, 1]} : vector<1x512xf32> to vector<1x128xf32>
    %46 = math.tanh %45 : vector<1x128xf32>
    %47 = vector.extract_strided_slice %32 {offsets = [0, 384], sizes = [1, 128], strides = [1, 1]} : vector<1x512xf32> to vector<1x128xf32>
    %48 = arith.negf %47 : vector<1x128xf32>
    %49 = math.exp %48 : vector<1x128xf32>
    %cst_33 = arith.constant 1.000000e+00 : f32
    %50 = vector.broadcast %cst_33 : f32 to vector<1x128xf32>
    %51 = arith.addf %50, %49 : vector<1x128xf32>
    %52 = arith.divf %50, %51 : vector<1x128xf32>
    %53 = arith.mulf %44, %4 : vector<1x128xf32>
    %54 = arith.mulf %38, %46 : vector<1x128xf32>
    %55 = arith.addf %53, %54 : vector<1x128xf32>
    %56 = math.tanh %55 : vector<1x128xf32>
    %57 = arith.mulf %52, %56 : vector<1x128xf32>
    %58 = tpu.concatenate %24, %57 in 1 : vector<1x128xf32>, vector<1x128xf32> -> vector<1x256xf32>
    %59 = arith.truncf %58 : vector<1x256xf32> to vector<1x256xbf16>
    %cst_34 = arith.constant dense<0.000000e+00> : vector<1x128xf32>
    %60 = tpu.matmul %59, %13, %cst_34 {dimension_numbers = #tpu.dot_dimension_numbers<[1], [0], [0], [1], [0, 0, 1, 1], [], []>} : vector<1x256xbf16>, vector<256x128xbf16>, vector<1x128xf32> -> vector<1x128xf32>
    %61 = arith.addf %60, %17 : vector<1x128xf32>
    %cst_35 = arith.constant 0.000000e+00 : f32
    %62 = vector.broadcast %cst_35 : f32 to vector<1x128xf32>
    %63 = arith.maximumf %61, %62 : vector<1x128xf32>
    %64 = arith.truncf %63 : vector<1x128xf32> to vector<1x128xbf16>
    %cst_36 = arith.constant dense<0.000000e+00> : vector<1x128xf32>
    %65 = tpu.matmul %64, %11, %cst_36 {dimension_numbers = #tpu.dot_dimension_numbers<[1], [0], [0], [1], [0, 0, 1, 1], [], []>} : vector<1x128xbf16>, vector<128x128xbf16>, vector<1x128xf32> -> vector<1x128xf32>
    %66 = arith.addf %65, %18 : vector<1x128xf32>
    %cst_37 = arith.constant 0.000000e+00 : f32
    %67 = vector.broadcast %cst_37 : f32 to vector<1x128xf32>
    %68 = arith.maximumf %66, %67 : vector<1x128xf32>
    %69 = arith.mulf %68, %19 : vector<1x128xf32>
    %cst_38 = arith.constant dense<0.000000e+00> : vector<1xf32>
    %70 = vector.multi_reduction <add>, %69, %cst_38 [1] : vector<1x128xf32> to vector<1xf32>
    %71 = vector.shape_cast %70 : vector<1xf32> to vector<1x1xf32>
    %72 = vector.shape_cast %71 : vector<1x1xf32> to vector<1x1xf32>
    %73 = vector.broadcast %72 : vector<1x1xf32> to vector<1x128xf32>
    %74 = arith.addf %73, %20 : vector<1x128xf32>
    %c0_39 = arith.constant 0 : index
    %c0_40 = arith.constant 0 : index
    %c0_41 = arith.constant 0 : index
    %75 = vector.load %arg6[%c0_39, %c0_40, %c0_41] : memref<1x1x128xf32, #tpu.memory_space<vmem>>, vector<1x1x128xf32>
    %76 = vector.shape_cast %75 : vector<1x1x128xf32> to vector<1x128xf32>
    %77 = vector.shape_cast %74 : vector<1x128xf32> to vector<1x1x128xf32>
    tpu.vector_store %arg6[%c0_39, %c0_40, %c0_41], %77 {strides = array<i32>} : memref<1x1x128xf32, #tpu.memory_space<vmem>>, vector<1x1x128xf32>,
    %c0_42 = arith.constant 0 : index
    %c0_43 = arith.constant 0 : index
    %78 = vector.load %arg7[%c0_42, %c0_43] : memref<1x256xf32, #tpu.memory_space<vmem>>, vector<1x128xf32>
    tpu.vector_store %arg7[%c0_42, %c0_43], %57 {strides = array<i32>} : memref<1x256xf32, #tpu.memory_space<vmem>>, vector<1x128xf32>,
    %c0_44 = arith.constant 0 : index
    %c128_45 = arith.constant 128 : index
    %79 = vector.load %arg7[%c0_44, %c128_45] : memref<1x256xf32, #tpu.memory_space<vmem>>, vector<1x128xf32>
    tpu.vector_store %arg7[%c0_44, %c128_45], %55 {strides = array<i32>} : memref<1x256xf32, #tpu.memory_space<vmem>>, vector<1x128xf32>,
    return
  }
  func.func @transform_0(%arg0: i32) -> (i32, i32, i32) {
    %c0_i32 = arith.constant 0 : i32
    %c0_i32_0 = arith.constant 0 : i32
    %c0_i32_1 = arith.constant 0 : i32
    return %arg0, %c0_i32, %c0_i32_0 : i32, i32, i32
  }
  func.func @transform_1(%arg0: i32) -> (i32, i32) {
    %c0_i32 = arith.constant 0 : i32
    %c0_i32_0 = arith.constant 0 : i32
    %c0_i32_1 = arith.constant 0 : i32
    return %c0_i32, %c0_i32_0 : i32, i32
  }
  func.func @transform_2(%arg0: i32) -> (i32, i32) {
    %c0_i32 = arith.constant 0 : i32
    %c0_i32_0 = arith.constant 0 : i32
    %c0_i32_1 = arith.constant 0 : i32
    return %c0_i32, %c0_i32_0 : i32, i32
  }
  func.func @transform_3(%arg0: i32) -> (i32, i32) {
    %c0_i32 = arith.constant 0 : i32
    %c0_i32_0 = arith.constant 0 : i32
    %c0_i32_1 = arith.constant 0 : i32
    return %c0_i32, %c0_i32_0 : i32, i32
  }
  func.func @transform_4(%arg0: i32) -> (i32, i32) {
    %c0_i32 = arith.constant 0 : i32
    %c0_i32_0 = arith.constant 0 : i32
    %c0_i32_1 = arith.constant 0 : i32
    return %c0_i32, %c0_i32_0 : i32, i32
  }
  func.func @transform_5(%arg0: i32) -> (i32, i32, i32) {
    %c0_i32 = arith.constant 0 : i32
    %c0_i32_0 = arith.constant 0 : i32
    %c0_i32_1 = arith.constant 0 : i32
    return %arg0, %c0_i32, %c0_i32_0 : i32, i32, i32
  }
  func.func @transform_6(%arg0: i32) -> (i32, i32) {
    %c0_i32 = arith.constant 0 : i32
    %c0_i32_0 = arith.constant 0 : i32
    %c0_i32_1 = arith.constant 0 : i32
    return %c0_i32, %c0_i32_0 : i32, i32
  }
}

</mosaic_0001>

<llo_original>
// kernel: critic_rollout.1
$region0: #{critic_rollout.1}
  #allocation0 [shape = 'u32[]', space=smem, size = 0x4, offset = 0x4, fixed_abs, tag = 'smem constant byte address 0x4 - core index']
  #allocation1 [shape = 'u32[144,128]{1,0:T(1,128)}', space=vmem, size = 0x12000, scoped, tag = 'internal scratch']
  %s0 = inlined_call_operand.vmem [shape: bf16[8,1,256], index: 0, kind: input, shape index: {}]
  %s1 = inlined_call_operand.vmem [shape: f32[1,256], index: 1, kind: input, shape index: {}]
  %s2 = inlined_call_operand.hbm [shape: bf16[128,384], index: 2, kind: input, shape index: {}]
  %s3 = inlined_call_operand.hbm [shape: bf16[256,640], index: 3, kind: input, shape index: {}]
  %s4 = inlined_call_operand.vmem [shape: f32[1,1280], index: 4, kind: input, shape index: {}]
  %s5 = inlined_call_operand.vmem [shape: f32[8,1,128], index: 5, kind: output, shape index: {0}]
  %s6 = inlined_call_operand.vmem [shape: f32[1,256], index: 6, kind: output, shape index: {1}]
  %7 = xla_tuple %s5, %s6
  %s8 = sld [smem:[#allocation0]]
  $region73: #{critic_rollout.1} parent=0
    _
  %s10 = ssub.s32 1, %s8
  %s11 = scalar_select 0, %s10, %s8
  $region1: #{critic_rollout.1} parent=0
    #allocation2 [shape = 'u8[98304]{0}', space=vmem, size = 0x18000, scoped, tag = 'input window, operand 2, single buffered']
    #allocation3 [shape = 's32[2]{0}', space=sflag, size = 0x8, scoped, tag = 'scoped memory for critic_rollout.1']
    #allocation4 [shape = 'u8[327680]{0}', space=vmem, size = 0x50000, scoped, tag = 'input window, operand 3, single buffered']
    #allocation5 [shape = 's32[1]{0}', space=sflag, size = 0x4, scoped, tag = 'scoped memory for critic_rollout.1']
    %12 = vsyncpa [#allocation3], 0
    %13 = vsyncpa [#allocation5], 0
    loop: start=0, step=1, limit=10
    $region2: #{critic_rollout.1} parent=1 // loop_pre_header
      _
    $region3: #{critic_rollout.1} parent=1 // loop_header
      %s15 = sphi 0, %s19
      %p16 = scmp.ge.s32.totalorder %s15, 10
      %s25 = sphi 0, %s27
      %s28 = sphi 0, %s25
      %s29 = sphi 0, %s28
      %s45 = sphi 0, %s29
      %s49 = sphi 0, %s49
      %s51 = sphi 0, %s49
      %s52 = sphi 0, %s51
      %s66 = sphi 0, %s52
      %s70 = sphi 0, %s70
      %s72 = sphi 0, %s70
      %s73 = sphi 0, %s72
      %s87 = sphi 0, %s73
      %s91 = sphi 0, %s91
      %s93 = sphi 0, %s91
      %s94 = sphi 0, %s93
      %s108 = sphi 0, %s94
      %s112 = sphi 0, %s112
      %s114 = sphi 0, %s112
      %s115 = sphi 0, %s114
      %s129 = sphi 0, %s115
      %s135 = sphi 0, %s137
      %s138 = sphi 0, %s135
      %s139 = sphi 0, %s138
      %s155 = sphi 0, %s139
      %s159 = sphi 0, %s159
      %s161 = sphi 0, %s159
      %s162 = sphi 0, %s161
      %s176 = sphi 0, %s162
    $region4: #{critic_rollout.1} parent=1 // loop_header_branch
      %18 = sbr.rel (%p16) target = $region8
    $region5: #{critic_rollout.1} parent=1 // loop_body
      %s20 = ssub.s32 %s15, 1
      %s21 = ssub.s32 %s15, 2
      %s22 = sadd.s32 %s15, 1
      %s23 = ssub.s32 %s15, %s22
      %p24 = scmp.eq.s32.totalorder %s23, 0
      %s26 = sadd.s32 %s25, 1
      %s27 = scalar_select %p24, %s25, %s26
      %p30 = pneg %p24
      %p31 = scmp.eq.s32.totalorder %s15, 7
      %p32 = por %p30, %p31
      %p33 = scmp.ne.s32.totalorder %s25, %s28
      %p34 = scmp.eq.s32.totalorder %s15, 0
      %p35 = por %p33, %p34
      %p36 = scmp.ne.s32.totalorder %s25, %s28
      %p37 = scmp.eq.s32.totalorder %s20, 7
      %p38 = por %p36, %p37
      %p39 = scmp.ne.s32.totalorder %s28, %s29
      %p40 = scmp.eq.s32.totalorder %s20, 0
      %p41 = por %p39, %p40
      %p42 = scmp.ne.s32.totalorder %s28, %s29
      %p43 = scmp.eq.s32.totalorder %s21, 7
      %p44 = por %p42, %p43
      %p46 = scmp.ne.s32.totalorder %s29, %s45
      %p47 = scmp.eq.s32.totalorder %s21, 0
      %p48 = por %p46, %p47
      %s50 = sadd.s32 %s49, 1
      %p53 = scmp.eq.s32.totalorder %s15, 7
      %p54 = scmp.ne.s32.totalorder %s49, %s51
      %p55 = scmp.eq.s32.totalorder %s15, 0
      %p56 = por %p54, %p55
      %p57 = scmp.ne.s32.totalorder %s49, %s51
      %p58 = scmp.eq.s32.totalorder %s20, 7
      %p59 = por %p57, %p58
      %p60 = scmp.ne.s32.totalorder %s51, %s52
      %p61 = scmp.eq.s32.totalorder %s20, 0
      %p62 = por %p60, %p61
      %p63 = scmp.ne.s32.totalorder %s51, %s52
      %p64 = scmp.eq.s32.totalorder %s21, 7
      %p65 = por %p63, %p64
      %p67 = scmp.ne.s32.totalorder %s52, %s66
      %p68 = scmp.eq.s32.totalorder %s21, 0
      %p69 = por %p67, %p68
      %s71 = sadd.s32 %s70, 1
      %p74 = scmp.eq.s32.totalorder %s15, 7
      %p75 = scmp.ne.s32.totalorder %s70, %s72
      %p76 = scmp.eq.s32.totalorder %s15, 0
      %p77 = por %p75, %p76
      %p78 = scmp.ne.s32.totalorder %s70, %s72
      %p79 = scmp.eq.s32.totalorder %s20, 7
      %p80 = por %p78, %p79
      %p81 = scmp.ne.s32.totalorder %s72, %s73
      %p82 = scmp.eq.s32.totalorder %s20, 0
      %p83 = por %p81, %p82
      %p84 = scmp.ne.s32.totalorder %s72, %s73
      %p85 = scmp.eq.s32.totalorder %s21, 7
      %p86 = por %p84, %p85
      %p88 = scmp.ne.s32.totalorder %s73, %s87
      %p89 = scmp.eq.s32.totalorder %s21, 0
      %p90 = por %p88, %p89
      %s92 = sadd.s32 %s91, 1
      %p95 = scmp.eq.s32.totalorder %s15, 7
      %p96 = scmp.ne.s32.totalorder %s91, %s93
      %p97 = scmp.eq.s32.totalorder %s15, 0
      %p98 = por %p96, %p97
      %p99 = scmp.ne.s32.totalorder %s91, %s93
      %p100 = scmp.eq.s32.totalorder %s20, 7
      %p101 = por %p99, %p100
      %p102 = scmp.ne.s32.totalorder %s93, %s94
      %p103 = scmp.eq.s32.totalorder %s20, 0
      %p104 = por %p102, %p103
      %p105 = scmp.ne.s32.totalorder %s93, %s94
      %p106 = scmp.eq.s32.totalorder %s21, 7
      %p107 = por %p105, %p106
      %p109 = scmp.ne.s32.totalorder %s94, %s108
      %p110 = scmp.eq.s32.totalorder %s21, 0
      %p111 = por %p109, %p110
      %s113 = sadd.s32 %s112, 1
      %p116 = scmp.eq.s32.totalorder %s15, 7
      %p117 = scmp.ne.s32.totalorder %s112, %s114
      %p118 = scmp.eq.s32.totalorder %s15, 0
      %p119 = por %p117, %p118
      %p120 = scmp.ne.s32.totalorder %s112, %s114
      %p121 = scmp.eq.s32.totalorder %s20, 7
      %p122 = por %p120, %p121
      %p123 = scmp.ne.s32.totalorder %s114, %s115
      %p124 = scmp.eq.s32.totalorder %s20, 0
      %p125 = por %p123, %p124
      %p126 = scmp.ne.s32.totalorder %s114, %s115
      %p127 = scmp.eq.s32.totalorder %s21, 7
      %p128 = por %p126, %p127
      %p130 = scmp.ne.s32.totalorder %s115, %s129
      %p131 = scmp.eq.s32.totalorder %s21, 0
      %p132 = por %p130, %p131
      %s133 = ssub.s32 %s15, %s22
      %p134 = scmp.eq.s32.totalorder %s133, 0
      %s136 = sadd.s32 %s135, 1
      %s137 = scalar_select %p134, %s135, %s136
      %p140 = pneg %p134
      %p141 = scmp.eq.s32.totalorder %s15, 7
      %p142 = por %p140, %p141
      %p143 = scmp.ne.s32.totalorder %s135, %s138
      %p144 = scmp.eq.s32.totalorder %s15, 0
      %p145 = por %p143, %p144
      %p146 = scmp.ne.s32.totalorder %s135, %s138
      %p147 = scmp.eq.s32.totalorder %s20, 7
      %p148 = por %p146, %p147
      %p149 = scmp.ne.s32.totalorder %s138, %s139
      %p150 = scmp.eq.s32.totalorder %s20, 0
      %p151 = por %p149, %p150
      %p152 = scmp.ne.s32.totalorder %s138, %s139
      %p153 = scmp.eq.s32.totalorder %s21, 7
      %p154 = por %p152, %p153
      %p156 = scmp.ne.s32.totalorder %s139, %s155
      %p157 = scmp.eq.s32.totalorder %s21, 0
      %p158 = por %p156, %p157
      %s160 = sadd.s32 %s159, 1
      %p163 = scmp.eq.s32.totalorder %s15, 7
      %p164 = scmp.ne.s32.totalorder %s159, %s161
      %p165 = scmp.eq.s32.totalorder %s15, 0
      %p166 = por %p164, %p165
      %p167 = scmp.ne.s32.totalorder %s159, %s161
      %p168 = scmp.eq.s32.totalorder %s20, 7
      %p169 = por %p167, %p168
      %p170 = scmp.ne.s32.totalorder %s161, %s162
      %p171 = scmp.eq.s32.totalorder %s20, 0
      %p172 = por %p170, %p171
      %p173 = scmp.ne.s32.totalorder %s161, %s162
      %p174 = scmp.eq.s32.totalorder %s21, 7
      %p175 = por %p173, %p174
      %p177 = scmp.ne.s32.totalorder %s162, %s176
      %p178 = scmp.eq.s32.totalorder %s21, 0
      %p179 = por %p177, %p178
      %p180 = scmp.le.s32.totalorder 1, %s15
      %p181 = scmp.lt.s32.totalorder %s15, 9
      %p182 = pnand %p180, %p181
      %p183 = pneg %p182
      // Predicated region
      $region9: #{critic_rollout.1} parent=5 // pred_check
        _
      $region10: #{critic_rollout.1} parent=5 // pred_check_branch
        %185 = sbr.rel (%p182) target = $region12
      $region11: #{critic_rollout.1} parent=5 // pred_region
        %s186 = ssub.s32 %s15, 1
        // Predicated region
        $region13: #{critic_rollout.1} parent=11 // pred_check
          %p187 = pneg %p62
        $region14: #{critic_rollout.1} parent=11 // pred_check_branch
          %189 = sbr.rel (%p187) target = $region16
        $region15: #{critic_rollout.1} parent=11 // pred_region
          _
        $region16: #{critic_rollout.1} parent=11 // pred_fallthru
          _
        // Predicated region
        $region17: #{critic_rollout.1} parent=11 // pred_check
          %p190 = pneg %p83
        $region18: #{critic_rollout.1} parent=11 // pred_check_branch
          %192 = sbr.rel (%p190) target = $region20
        $region19: #{critic_rollout.1} parent=11 // pred_region
          %s194 = ssub.s32 3072, 3072
          %195 = vsyncadd [#allocation3], %s194
          %s196 = sshll.u32 [#allocation2], 4
          %s197 = int_to_ptr.vmem [resolvable:$true] %s196
          %202 = dma.hbm_to_vmem [thread:$0]  %s2, 3072, %s197, [#allocation3], 192, 192, 12
        $region20: #{critic_rollout.1} parent=11 // pred_fallthru
          _
        // Predicated region
        $region21: #{critic_rollout.1} parent=11 // pred_check
          %p203 = pneg %p104
        $region22: #{critic_rollout.1} parent=11 // pred_check_branch
          %205 = sbr.rel (%p203) target = $region24
        $region23: #{critic_rollout.1} parent=11 // pred_region
          %s207 = ssub.s32 10240, 10240
          %208 = vsyncadd [#allocation5], %s207
          %s209 = sshll.u32 [#allocation4], 4
          %s210 = int_to_ptr.vmem [resolvable:$true] %s209
          %215 = dma.hbm_to_vmem [thread:$0]  %s3, 10240, %s210, [#allocation5], 320, 320, 20
        $region24: #{critic_rollout.1} parent=11 // pred_fallthru
          _
        // Predicated region
        $region25: #{critic_rollout.1} parent=11 // pred_check
          %p216 = pneg %p125
        $region26: #{critic_rollout.1} parent=11 // pred_check_branch
          %218 = sbr.rel (%p216) target = $region28
        $region27: #{critic_rollout.1} parent=11 // pred_region
          _
        $region28: #{critic_rollout.1} parent=11 // pred_fallthru
          _
      $region12: #{critic_rollout.1} parent=5 // pred_fallthru
        _
      %p219 = scmp.lt.s32.totalorder %s15, 8
      // Predicated region
      $region29: #{critic_rollout.1} parent=5 // pred_check
        %p220 = pneg %p219
      $region30: #{critic_rollout.1} parent=5 // pred_check_branch
        %222 = sbr.rel (%p220) target = $region32
      $region31: #{critic_rollout.1} parent=5 // pred_region
        // Predicated region
        $region33: #{critic_rollout.1} parent=31 // pred_check
          %p223 = pneg %p35
        $region34: #{critic_rollout.1} parent=31 // pred_check_branch
          %225 = sbr.rel (%p223) target = $region36
        $region35: #{critic_rollout.1} parent=31 // pred_region
          %p226 = scmp.lt.s32.totalorder %s15, 7
          %s227 = scalar_select %p226, %s15, 7
          %s228 = smul.addr %s227, 2
          %s229 = scalar_lea.vmem %s0, %s228
        $region36: #{critic_rollout.1} parent=31 // pred_fallthru
          _
      $region32: #{critic_rollout.1} parent=5 // pred_fallthru
        _
      %p230 = scmp.le.s32.totalorder 1, %s15
      %p231 = scmp.lt.s32.totalorder %s15, 9
      %p232 = pnand %p230, %p231
      %p233 = pneg %p232
      // Predicated region
      $region37: #{critic_rollout.1} parent=5 // pred_check
        _
      $region38: #{critic_rollout.1} parent=5 // pred_check_branch
        %235 = sbr.rel (%p232) target = $region40
      $region39: #{critic_rollout.1} parent=5 // pred_region
        %s236 = ssub.s32 %s15, 1
        // Predicated region
        $region41: #{critic_rollout.1} parent=39 // pred_check
          %p237 = pneg %p83
        $region42: #{critic_rollout.1} parent=39 // pred_check_branch
          %239 = sbr.rel (%p237) target = $region44
        $region43: #{critic_rollout.1} parent=39 // pred_region
          %240 = dma.done [#allocation3], 3072
        $region44: #{critic_rollout.1} parent=39 // pred_fallthru
          _
        // Predicated region
        $region45: #{critic_rollout.1} parent=39 // pred_check
          %p241 = pneg %p104
        $region46: #{critic_rollout.1} parent=39 // pred_check_branch
          %243 = sbr.rel (%p241) target = $region48
        $region47: #{critic_rollout.1} parent=39 // pred_region
          %244 = dma.done [#allocation5], 10240
        $region48: #{critic_rollout.1} parent=39 // pred_fallthru
          _
        %p245 = scmp.lt.s32.totalorder %s20, 7
        %s246 = scalar_select %p245, %s20, 7
        %s247 = smul.addr %s246, 2
        %s248 = scalar_lea.vmem %s0, %s247
        %p249 = pneg %p41
        %p250 = pneg %p38
        %p251 = pneg %p62
        %p252 = pneg %p59
        %p253 = pneg %p83
        %p254 = pneg %p80
        %p255 = pneg %p104
        %p256 = pneg %p101
        %p257 = pneg %p125
        %p258 = pneg %p122
        %p259 = pneg %p151
        %p260 = pneg %p148
        %p261 = scmp.lt.s32.totalorder %s20, 7
        %s262 = scalar_select %p261, %s20, 7
        %s263 = scalar_lea.vmem %s5, %s262
        %p264 = pneg %p172
        %p265 = pneg %p169
        %p266 = scmp.lt.s32.totalorder %s20, 7
        %s267 = scalar_select %p266, %s20, 7
        %s268 = smul.addr %s267, 2
        %s269 = scalar_lea.vmem %s0, %s268
        %p270 = scmp.lt.s32.totalorder %s20, 7
        %s271 = scalar_select %p270, %s20, 7
        %s272 = scalar_lea.vmem %s5, %s271
        %p274 = scmp.eq.s32.totalorder %s20, 0
        // Predicated region
        $region49: #{critic_rollout.1} parent=39 // pred_check
          %p275 = pneg %p274
        $region50: #{critic_rollout.1} parent=39 // pred_check_branch
          %277 = sbr.rel (%p275) target = $region52
        $region51: #{critic_rollout.1} parent=39 // pred_region
          %v278 = vld [vmem:[%s1] sm:$0x3]
          %v279 = vlaneseq
          %vm280 = vcmp.ge.s32.totalorder %v279, 0
          %vm281 = vcmp.lt.s32.totalorder %v279, 256
          %vm282 = vmand %vm280, %vm281
          %283 = vst.msk [vmem:[%s6] sm:$0x3] %vm282, %v278
        $region52: #{critic_rollout.1} parent=39 // pred_fallthru
          _
        %v284 = vld [vmem:[%s6] sm:$0x1]
        %v285 = vld [vmem:[%s6 + $0x1] sm:$0x1]
        %v286 = vld [vmem:[%s269] sm:$0x1]
        %v287 = vld [vmem:[%s269 + $0x1] sm:$0x1]
        %v288 = vld [vmem:[#allocation2] sm:$0xf]
        %v289 = vld [vmem:[#allocation2 + $0xc] sm:$0xf]
        %v290 = vld [vmem:[#allocation2 + $0x18] sm:$0xf]
        %v291 = vld [vmem:[#allocation2 + $0x24] sm:$0xf]
        %v292 = vld [vmem:[#allocation2 + $0x30] sm:$0xf]
        %v293 = vld [vmem:[#allocation2 + $0x3c] sm:$0xf]
        %v294 = vld [vmem:[#allocation2 + $0x48] sm:$0xf]
        %v295 = vld [vmem:[#allocation2 + $0x54] sm:$0xf]
        %v296 = vld [vmem:[#allocation2 + $0x60] sm:$0xf]
        %v297 = vld [vmem:[#allocation2 + $0x6c] sm:$0xf]
        %v298 = vld [vmem:[#allocation2 + $0x78] sm:$0xf]
        %v299 = vld [vmem:[#allocation2 + $0x84] sm:$0xf]
        %v300 = vld [vmem:[#allocation2 + $0x90] sm:$0xf]
        %v301 = vld [vmem:[#allocation2 + $0x9c] sm:$0xf]
        %v302 = vld [vmem:[#allocation2 + $0xa8] sm:$0xf]
        %v303 = vld [vmem:[#allocation2 + $0xb4] sm:$0xf]
        %v304 = vld [vmem:[#allocation2 + $0x4] sm:$0xf]
        %v305 = vld [vmem:[#allocation2 + $0x10] sm:$0xf]
        %v306 = vld [vmem:[#allocation2 + $0x1c] sm:$0xf]
        %v307 = vld [vmem:[#allocation2 + $0x28] sm:$0xf]
        %v308 = vld [vmem:[#allocation2 + $0x34] sm:$0xf]
        %v309 = vld [vmem:[#allocation2 + $0x40] sm:$0xf]
        %v310 = vld [vmem:[#allocation2 + $0x4c] sm:$0xf]
        %v311 = vld [vmem:[#allocation2 + $0x58] sm:$0xf]
        %v312 = vld [vmem:[#allocation2 + $0x64] sm:$0xf]
        %v313 = vld [vmem:[#allocation2 + $0x70] sm:$0xf]
        %v314 = vld [vmem:[#allocation2 + $0x7c] sm:$0xf]
        %v315 = vld [vmem:[#allocation2 + $0x88] sm:$0xf]
        %v316 = vld [vmem:[#allocation2 + $0x94] sm:$0xf]
        %v317 = vld [vmem:[#allocation2 + $0xa0] sm:$0xf]
        %v318 = vld [vmem:[#allocation2 + $0xac] sm:$0xf]
        %v319 = vld [vmem:[#allocation2 + $0xb8] sm:$0xf]
        %v320 = vld [vmem:[#allocation2 + $0x8] sm:$0xf]
        %v321 = vld [vmem:[#allocation2 + $0x14] sm:$0xf]
        %v322 = vld [vmem:[#allocation2 + $0x20] sm:$0xf]
        %v323 = vld [vmem:[#allocation2 + $0x2c] sm:$0xf]
        %v324 = vld [vmem:[#allocation2 + $0x38] sm:$0xf]
        %v325 = vld [vmem:[#allocation2 + $0x44] sm:$0xf]
        %v326 = vld [vmem:[#allocation2 + $0x50] sm:$0xf]
        %v327 = vld [vmem:[#allocation2 + $0x5c] sm:$0xf]
        %v328 = vld [vmem:[#allocation2 + $0x68] sm:$0xf]
        %v329 = vld [vmem:[#allocation2 + $0x74] sm:$0xf]
        %v330 = vld [vmem:[#allocation2 + $0x80] sm:$0xf]
        %v331 = vld [vmem:[#allocation2 + $0x8c] sm:$0xf]
        %v332 = vld [vmem:[#allocation2 + $0x98] sm:$0xf]
        %v333 = vld [vmem:[#allocation2 + $0xa4] sm:$0xf]
        %v334 = vld [vmem:[#allocation2 + $0xb0] sm:$0xf]
        %v335 = vld [vmem:[#allocation2 + $0xbc] sm:$0xf]
        %v336 = vld [vmem:[#allocation4] sm:$0xff]
        %v337 = vld [vmem:[#allocation4 + $0x8] sm:$0xff]
        %v338 = vld [vmem:[#allocation4 + $0x14] sm:$0xff]
        %v339 = vld [vmem:[#allocation4 + $0x1c] sm:$0xff]
        %v340 = vld [vmem:[#allocation4 + $0x28] sm:$0xff]
        %v341 = vld [vmem:[#allocation4 + $0x30] sm:$0xff]
        %v342 = vld [vmem:[#allocation4 + $0x3c] sm:$0xff]
        %v343 = vld [vmem:[#allocation4 + $0x44] sm:$0xff]
        %v344 = vld [vmem:[#allocation4 + $0x50] sm:$0xff]
        %v345 = vld [vmem:[#allocation4 + $0x58] sm:$0xff]
        %v346 = vld [vmem:[#allocation4 + $0x64] sm:$0xff]
        %v347 = vld [vmem:[#allocation4 + $0x6c] sm:$0xff]
        %v348 = vld [vmem:[#allocation4 + $0x78] sm:$0xff]
        %v349 = vld [vmem:[#allocation4 + $0x80] sm:$0xff]
        %v350 = vld [vmem:[#allocation4 + $0x8c] sm:$0xff]
        %v351 = vld [vmem:[#allocation4 + $0x94] sm:$0xff]
        %v352 = vld [vmem:[#allocation4 + $0xa0] sm:$0xff]
        %v353 = vld [vmem:[#allocation4 + $0xa8] sm:$0xff]
        %v354 = vld [vmem:[#allocation4 + $0xb4] sm:$0xff]
        %v355 = vld [vmem:[#allocation4 + $0xbc] sm:$0xff]
        %v356 = vld [vmem:[#allocation4 + $0xc8] sm:$0xff]
        %v357 = vld [vmem:[#allocation4 + $0xd0] sm:$0xff]
        %v358 = vld [vmem:[#allocation4 + $0xdc] sm:$0xff]
        %v359 = vld [vmem:[#allocation4 + $0xe4] sm:$0xff]
        %v360 = vld [vmem:[#allocation4 + $0xf0] sm:$0xff]
        %v361 = vld [vmem:[#allocation4 + $0xf8] sm:$0xff]
        %v362 = vld [vmem:[#allocation4 + $0x104] sm:$0xff]
        %v363 = vld [vmem:[#allocation4 + $0x10c] sm:$0xff]
        %v364 = vld [vmem:[#allocation4 + $0x118] sm:$0xff]
        %v365 = vld [vmem:[#allocation4 + $0x120] sm:$0xff]
        %v366 = vld [vmem:[#allocation4 + $0x12c] sm:$0xff]
        %v367 = vld [vmem:[#allocation4 + $0x134] sm:$0xff]
        %v368 = vld [vmem:[#allocation4 + $0x140] sm:$0xff]
        %v369 = vld [vmem:[#allocation4 + $0x148] sm:$0xff]
        %v370 = vld [vmem:[#allocation4 + $0x154] sm:$0xff]
        %v371 = vld [vmem:[#allocation4 + $0x15c] sm:$0xff]
        %v372 = vld [vmem:[#allocation4 + $0x168] sm:$0xff]
        %v373 = vld [vmem:[#allocation4 + $0x170] sm:$0xff]
        %v374 = vld [vmem:[#allocation4 + $0x17c] sm:$0xff]
        %v375 = vld [vmem:[#allocation4 + $0x184] sm:$0xff]
        %v376 = vld [vmem:[#allocation4 + $0x190] sm:$0xff]
        %v377 = vld [vmem:[#allocation4 + $0x198] sm:$0xff]
        %v378 = vld [vmem:[#allocation4 + $0x1a4] sm:$0xff]
        %v379 = vld [vmem:[#allocation4 + $0x1ac] sm:$0xff]
        %v380 = vld [vmem:[#allocation4 + $0x1b8] sm:$0xff]
        %v381 = vld [vmem:[#allocation4 + $0x1c0] sm:$0xff]
        %v382 = vld [vmem:[#allocation4 + $0x1cc] sm:$0xff]
        %v383 = vld [vmem:[#allocation4 + $0x1d4] sm:$0xff]
        %v384 = vld [vmem:[#allocation4 + $0x1e0] sm:$0xff]
        %v385 = vld [vmem:[#allocation4 + $0x1e8] sm:$0xff]
        %v386 = vld [vmem:[#allocation4 + $0x1f4] sm:$0xff]
        %v387 = vld [vmem:[#allocation4 + $0x1fc] sm:$0xff]
        %v388 = vld [vmem:[#allocation4 + $0x208] sm:$0xff]
        %v389 = vld [vmem:[#allocation4 + $0x210] sm:$0xff]
        %v390 = vld [vmem:[#allocation4 + $0x21c] sm:$0xff]
        %v391 = vld [vmem:[#allocation4 + $0x224] sm:$0xff]
        %v392 = vld [vmem:[#allocation4 + $0x230] sm:$0xff]
        %v393 = vld [vmem:[#allocation4 + $0x238] sm:$0xff]
        %v394 = vld [vmem:[#allocation4 + $0x244] sm:$0xff]
        %v395 = vld [vmem:[#allocation4 + $0x24c] sm:$0xff]
        %v396 = vld [vmem:[#allocation4 + $0x258] sm:$0xff]
        %v397 = vld [vmem:[#allocation4 + $0x260] sm:$0xff]
        %v398 = vld [vmem:[#allocation4 + $0x26c] sm:$0xff]
        %v399 = vld [vmem:[#allocation4 + $0x274] sm:$0xff]
        %v400 = vld [vmem:[#allocation4 + $0x10] sm:$0xf]
        %v401 = vld [vmem:[#allocation4 + $0x24] sm:$0xf]
        %v402 = vld [vmem:[#allocation4 + $0x38] sm:$0xf]
        %v403 = vld [vmem:[#allocation4 + $0x4c] sm:$0xf]
        %v404 = vld [vmem:[#allocation4 + $0x60] sm:$0xf]
        %v405 = vld [vmem:[#allocation4 + $0x74] sm:$0xf]
        %v406 = vld [vmem:[#allocation4 + $0x88] sm:$0xf]
        %v407 = vld [vmem:[#allocation4 + $0x9c] sm:$0xf]
        %v408 = vld [vmem:[#allocation4 + $0xb0] sm:$0xf]
        %v409 = vld [vmem:[#allocation4 + $0xc4] sm:$0xf]
        %v410 = vld [vmem:[#allocation4 + $0xd8] sm:$0xf]
        %v411 = vld [vmem:[#allocation4 + $0xec] sm:$0xf]
        %v412 = vld [vmem:[#allocation4 + $0x100] sm:$0xf]
        %v413 = vld [vmem:[#allocation4 + $0x114] sm:$0xf]
        %v414 = vld [vmem:[#allocation4 + $0x128] sm:$0xf]
        %v415 = vld [vmem:[#allocation4 + $0x13c] sm:$0xf]
        %v416 = vld [vmem:[#allocation4 + $0x150] sm:$0xf]
        %v417 = vld [vmem:[#allocation4 + $0x164] sm:$0xf]
        %v418 = vld [vmem:[#allocation4 + $0x178] sm:$0xf]
        %v419 = vld [vmem:[#allocation4 + $0x18c] sm:$0xf]
        %v420 = vld [vmem:[#allocation4 + $0x1a0] sm:$0xf]
        %v421 = vld [vmem:[#allocation4 + $0x1b4] sm:$0xf]
        %v422 = vld [vmem:[#allocation4 + $0x1c8] sm:$0xf]
        %v423 = vld [vmem:[#allocation4 + $0x1dc] sm:$0xf]
        %v424 = vld [vmem:[#allocation4 + $0x1f0] sm:$0xf]
        %v425 = vld [vmem:[#allocation4 + $0x204] sm:$0xf]
        %v426 = vld [vmem:[#allocation4 + $0x218] sm:$0xf]
        %v427 = vld [vmem:[#allocation4 + $0x22c] sm:$0xf]
        %v428 = vld [vmem:[#allocation4 + $0x240] sm:$0xf]
        %v429 = vld [vmem:[#allocation4 + $0x254] sm:$0xf]
        %v430 = vld [vmem:[#allocation4 + $0x268] sm:$0xf]
        %v431 = vld [vmem:[#allocation4 + $0x27c] sm:$0xf]
        %v432 = vld [vmem:[%s4] sm:$0x1]
        %v433 = vld [vmem:[%s4 + $0x1] sm:$0x1]
        %v434 = vld [vmem:[%s4 + $0x2] sm:$0xf]
        %v435 = vld [vmem:[%s4 + $0x6] sm:$0x1]
        %v436 = vld [vmem:[%s4 + $0x7] sm:$0x1]
        %v437 = vld [vmem:[%s4 + $0x8] sm:$0x1]
        %v438 = vld [vmem:[%s4 + $0x9] sm:$0x1]
        %v455 = vunpack.c.l.b16 %v288
        %v456 = vunpack.c.l.b16 %v289
        %v457 = vunpack.c.l.b16 %v290
        %v458 = vunpack.c.l.b16 %v291
        %v459 = vunpack.c.l.b16 %v292
        %v460 = vunpack.c.l.b16 %v293
        %v461 = vunpack.c.l.b16 %v294
        %v462 = vunpack.c.l.b16 %v295
        %v463 = vunpack.c.l.b16 %v296
        %v464 = vunpack.c.l.b16 %v297
        %v465 = vunpack.c.l.b16 %v298
        %v466 = vunpack.c.l.b16 %v299
        %v467 = vunpack.c.l.b16 %v300
        %v468 = vunpack.c.l.b16 %v301
        %v469 = vunpack.c.l.b16 %v302
        %v470 = vunpack.c.l.b16 %v303
        %v471 = vpack.c.b16 %v456, %v455
        %v472 = vpack.c.b16 %v458, %v457
        %v473 = vpack.c.b16 %v460, %v459
        %v474 = vpack.c.b16 %v462, %v461
        %v475 = vpack.c.b16 %v464, %v463
        %v476 = vpack.c.b16 %v466, %v465
        %v477 = vpack.c.b16 %v468, %v467
        %v478 = vpack.c.b16 %v470, %v469
        %487 = vmatprep.subr.bf16.mxu0 0
        %488 = vmatpush1.bf16.msra.mxu0 %v478
        %489 = vmatprep.subr.bf16.mxu0 0
        %490 = vmatpush1.bf16.msra.mxu0 %v477
        %491 = vmatprep.subr.bf16.mxu0 0
        %492 = vmatpush1.bf16.msra.mxu0 %v476
        %493 = vmatprep.subr.bf16.mxu0 0
        %494 = vmatpush1.bf16.msra.mxu0 %v475
        %495 = vmatprep.subr.bf16.mxu0 0
        %496 = vmatpush1.bf16.msra.mxu0 %v474
        %497 = vmatprep.subr.bf16.mxu0 0
        %498 = vmatpush1.bf16.msra.mxu0 %v473
        %499 = vmatprep.subr.bf16.mxu0 0
        %500 = vmatpush1.bf16.msra.mxu0 %v472
        %501 = vmatprep.subr.bf16.mxu0 0
        %502 = vmatpush1.bf16.msra.mxu0 %v471
        %503 = vmatprep.subr.bf16.mxu0 0
        %504 = vmatpush2.bf16.msra.mxu0 0
        %505 = vmatprep.subr.bf16.mxu0 0
        %506 = vmatpush2.bf16.msra.mxu0 0
        %507 = vmatprep.subr.bf16.mxu0 0
        %508 = vmatpush2.bf16.msra.mxu0 0
        %509 = vmatprep.subr.bf16.mxu0 0
        %510 = vmatpush2.bf16.msra.mxu0 0
        %511 = vmatprep.subr.bf16.mxu0 0
        %512 = vmatpush2.bf16.msra.mxu0 0
        %513 = vmatprep.subr.bf16.mxu0 0
        %514 = vmatpush2.bf16.msra.mxu0 0
        %515 = vmatprep.subr.bf16.mxu0 0
        %516 = vmatpush2.bf16.msra.mxu0 0
        %517 = vmatprep.subr.bf16.mxu0 0
        %518 = vmatpush2.bf16.msra.mxu0 0
        %519 = vmatprep.mubr.bf16.mxu0 0
        %520 = vmatmul.mubr.bf16.gmra.mxu0 %v286
        %v521 = vpop.f32.mrf.mxu0
        %v522 = vadd.f32 %v432, %v521
        %v523 = vpop.f32.mrf.mxu0
        %v524 = vpop.f32.mrf.mxu0
        %v525 = vpop.f32.mrf.mxu0
        %526 = vdwg.mxu0
        %v527 = vmax.f32 %v522, 0.0
        %v544 = vunpack.c.l.b16 %v304
        %v545 = vunpack.c.l.b16 %v305
        %v546 = vunpack.c.l.b16 %v306
        %v547 = vunpack.c.l.b16 %v307
        %v548 = vunpack.c.l.b16 %v308
        %v549 = vunpack.c.l.b16 %v309
        %v550 = vunpack.c.l.b16 %v310
        %v551 = vunpack.c.l.b16 %v311
        %v552 = vunpack.c.l.b16 %v312
        %v553 = vunpack.c.l.b16 %v313
        %v554 = vunpack.c.l.b16 %v314
        %v555 = vunpack.c.l.b16 %v315
        %v556 = vunpack.c.l.b16 %v316
        %v557 = vunpack.c.l.b16 %v317
        %v558 = vunpack.c.l.b16 %v318
        %v559 = vunpack.c.l.b16 %v319
        %v560 = vpack.c.b16 %v545, %v544
        %v561 = vpack.c.b16 %v547, %v546
        %v562 = vpack.c.b16 %v549, %v548
        %v563 = vpack.c.b16 %v551, %v550
        %v564 = vpack.c.b16 %v553, %v552
        %v565 = vpack.c.b16 %v555, %v554
        %v566 = vpack.c.b16 %v557, %v556
        %v567 = vpack.c.b16 %v559, %v558
        %576 = vmatprep.subr.bf16.mxu0 0
        %577 = vmatpush1.bf16.msra.mxu0 %v567
        %578 = vmatprep.subr.bf16.mxu0 0
        %579 = vmatpush1.bf16.msra.mxu0 %v566
        %580 = vmatprep.subr.bf16.mxu0 0
        %581 = vmatpush1.bf16.msra.mxu0 %v565
        %582 = vmatprep.subr.bf16.mxu0 0
        %583 = vmatpush1.bf16.msra.mxu0 %v564
        %584 = vmatprep.subr.bf16.mxu0 0
        %585 = vmatpush1.bf16.msra.mxu0 %v563
        %586 = vmatprep.subr.bf16.mxu0 0
        %587 = vmatpush1.bf16.msra.mxu0 %v562
        %588 = vmatprep.subr.bf16.mxu0 0
        %589 = vmatpush1.bf16.msra.mxu0 %v561
        %590 = vmatprep.subr.bf16.mxu0 0
        %591 = vmatpush1.bf16.msra.mxu0 %v560
        %592 = vmatprep.subr.bf16.mxu0 0
        %593 = vmatpush2.bf16.msra.mxu0 0
        %594 = vmatprep.subr.bf16.mxu0 0
        %595 = vmatpush2.bf16.msra.mxu0 0
        %596 = vmatprep.subr.bf16.mxu0 0
        %597 = vmatpush2.bf16.msra.mxu0 0
        %598 = vmatprep.subr.bf16.mxu0 0
        %599 = vmatpush2.bf16.msra.mxu0 0
        %600 = vmatprep.subr.bf16.mxu0 0
        %601 = vmatpush2.bf16.msra.mxu0 0
        %602 = vmatprep.subr.bf16.mxu0 0
        %603 = vmatpush2.bf16.msra.mxu0 0
        %604 = vmatprep.subr.bf16.mxu0 0
        %605 = vmatpush2.bf16.msra.mxu0 0
        %606 = vmatprep.subr.bf16.mxu0 0
        %607 = vmatpush2.bf16.msra.mxu0 0
        %608 = vmatprep.mubr.bf16.mxu0 0
        %609 = vmatmul.mubr.bf16.gmra.mxu0 %v287
        %v610 = vpop.f32.mrf.mxu0
        %v611 = vadd.f32 %v433, %v610
        %v612 = vpop.f32.mrf.mxu0
        %v613 = vpop.f32.mrf.mxu0
        %v614 = vpop.f32.mrf.mxu0
        %615 = vdwg.mxu0
        %v616 = vmax.f32 %v611, 0.0
        %v617 = vpack.c.bf16 %v616, %v616
        %v618 = vpack.c.bf16 %v284, %v284
        %v683 = vunpack.c.l.b16 %v336
        %v684 = vunpack.c.h.b16 %v336
        %v685 = vunpack.c.l.b16 %v337
        %v686 = vunpack.c.h.b16 %v337
        %v687 = vunpack.c.l.b16 %v338
        %v688 = vunpack.c.h.b16 %v338
        %v689 = vunpack.c.l.b16 %v339
        %v690 = vunpack.c.h.b16 %v339
        %v691 = vunpack.c.l.b16 %v340
        %v692 = vunpack.c.h.b16 %v340
        %v693 = vunpack.c.l.b16 %v341
        %v694 = vunpack.c.h.b16 %v341
        %v695 = vunpack.c.l.b16 %v342
        %v696 = vunpack.c.h.b16 %v342
        %v697 = vunpack.c.l.b16 %v343
        %v698 = vunpack.c.h.b16 %v343
        %v699 = vunpack.c.l.b16 %v344
        %v700 = vunpack.c.h.b16 %v344
        %v701 = vunpack.c.l.b16 %v345
        %v702 = vunpack.c.h.b16 %v345
        %v703 = vunpack.c.l.b16 %v346
        %v704 = vunpack.c.h.b16 %v346
        %v705 = vunpack.c.l.b16 %v347
        %v706 = vunpack.c.h.b16 %v347
        %v707 = vunpack.c.l.b16 %v348
        %v708 = vunpack.c.h.b16 %v348
        %v709 = vunpack.c.l.b16 %v349
        %v710 = vunpack.c.h.b16 %v349
        %v711 = vunpack.c.l.b16 %v350
        %v712 = vunpack.c.h.b16 %v350
        %v713 = vunpack.c.l.b16 %v351
        %v714 = vunpack.c.h.b16 %v351
        %v715 = vunpack.c.l.b16 %v352
        %v716 = vunpack.c.h.b16 %v352
        %v717 = vunpack.c.l.b16 %v353
        %v718 = vunpack.c.h.b16 %v353
        %v719 = vunpack.c.l.b16 %v354
        %v720 = vunpack.c.h.b16 %v354
        %v721 = vunpack.c.l.b16 %v355
        %v722 = vunpack.c.h.b16 %v355
        %v723 = vunpack.c.l.b16 %v356
        %v724 = vunpack.c.h.b16 %v356
        %v725 = vunpack.c.l.b16 %v357
        %v726 = vunpack.c.h.b16 %v357
        %v727 = vunpack.c.l.b16 %v358
        %v728 = vunpack.c.h.b16 %v358
        %v729 = vunpack.c.l.b16 %v359
        %v730 = vunpack.c.h.b16 %v359
        %v731 = vunpack.c.l.b16 %v360
        %v732 = vunpack.c.h.b16 %v360
        %v733 = vunpack.c.l.b16 %v361
        %v734 = vunpack.c.h.b16 %v361
        %v735 = vunpack.c.l.b16 %v362
        %v736 = vunpack.c.h.b16 %v362
        %v737 = vunpack.c.l.b16 %v363
        %v738 = vunpack.c.h.b16 %v363
        %v739 = vunpack.c.l.b16 %v364
        %v740 = vunpack.c.h.b16 %v364
        %v741 = vunpack.c.l.b16 %v365
        %v742 = vunpack.c.h.b16 %v365
        %v743 = vunpack.c.l.b16 %v366
        %v744 = vunpack.c.h.b16 %v366
        %v745 = vunpack.c.l.b16 %v367
        %v746 = vunpack.c.h.b16 %v367
        %v747 = vunpack.c.l.b16 %v368
        %v748 = vunpack.c.h.b16 %v368
        %v749 = vunpack.c.l.b16 %v369
        %v750 = vunpack.c.h.b16 %v369
        %v751 = vunpack.c.l.b16 %v370
        %v752 = vunpack.c.h.b16 %v370
        %v753 = vunpack.c.l.b16 %v371
        %v754 = vunpack.c.h.b16 %v371
        %v755 = vunpack.c.l.b16 %v372
        %v756 = vunpack.c.h.b16 %v372
        %v757 = vunpack.c.l.b16 %v373
        %v758 = vunpack.c.h.b16 %v373
        %v759 = vunpack.c.l.b16 %v374
        %v760 = vunpack.c.h.b16 %v374
        %v761 = vunpack.c.l.b16 %v375
        %v762 = vunpack.c.h.b16 %v375
        %v763 = vunpack.c.l.b16 %v376
        %v764 = vunpack.c.h.b16 %v376
        %v765 = vunpack.c.l.b16 %v377
        %v766 = vunpack.c.h.b16 %v377
        %v767 = vunpack.c.l.b16 %v378
        %v768 = vunpack.c.h.b16 %v378
        %v769 = vunpack.c.l.b16 %v379
        %v770 = vunpack.c.h.b16 %v379
        %v771 = vunpack.c.l.b16 %v380
        %v772 = vunpack.c.h.b16 %v380
        %v773 = vunpack.c.l.b16 %v381
        %v774 = vunpack.c.h.b16 %v381
        %v775 = vunpack.c.l.b16 %v382
        %v776 = vunpack.c.h.b16 %v382
        %v777 = vunpack.c.l.b16 %v383
        %v778 = vunpack.c.h.b16 %v383
        %v779 = vunpack.c.l.b16 %v384
        %v780 = vunpack.c.h.b16 %v384
        %v781 = vunpack.c.l.b16 %v385
        %v782 = vunpack.c.h.b16 %v385
        %v783 = vunpack.c.l.b16 %v386
        %v784 = vunpack.c.h.b16 %v386
        %v785 = vunpack.c.l.b16 %v387
        %v786 = vunpack.c.h.b16 %v387
        %v787 = vunpack.c.l.b16 %v388
        %v788 = vunpack.c.h.b16 %v388
        %v789 = vunpack.c.l.b16 %v389
        %v790 = vunpack.c.h.b16 %v389
        %v791 = vunpack.c.l.b16 %v390
        %v792 = vunpack.c.h.b16 %v390
        %v793 = vunpack.c.l.b16 %v391
        %v794 = vunpack.c.h.b16 %v391
        %v795 = vunpack.c.l.b16 %v392
        %v796 = vunpack.c.h.b16 %v392
        %v797 = vunpack.c.l.b16 %v393
        %v798 = vunpack.c.h.b16 %v393
        %v799 = vunpack.c.l.b16 %v394
        %v800 = vunpack.c.h.b16 %v394
        %v801 = vunpack.c.l.b16 %v395
        %v802 = vunpack.c.h.b16 %v395
        %v803 = vunpack.c.l.b16 %v396
        %v804 = vunpack.c.h.b16 %v396
        %v805 = vunpack.c.l.b16 %v397
        %v806 = vunpack.c.h.b16 %v397
        %v807 = vunpack.c.l.b16 %v398
        %v808 = vunpack.c.h.b16 %v398
        %v809 = vunpack.c.l.b16 %v399
        %v810 = vunpack.c.h.b16 %v399
        %v811 = vpack.c.b16 %v687, %v683
        %v812 = vpack.c.b16 %v688, %v684
        %v813 = vpack.c.b16 %v689, %v685
        %v814 = vpack.c.b16 %v690, %v686
        %v815 = vpack.c.b16 %v695, %v691
        %v816 = vpack.c.b16 %v696, %v692
        %v817 = vpack.c.b16 %v697, %v693
        %v818 = vpack.c.b16 %v698, %v694
        %v819 = vpack.c.b16 %v703, %v699
        %v820 = vpack.c.b16 %v704, %v700
        %v821 = vpack.c.b16 %v705, %v701
        %v822 = vpack.c.b16 %v706, %v702
        %v823 = vpack.c.b16 %v711, %v707
        %v824 = vpack.c.b16 %v712, %v708
        %v825 = vpack.c.b16 %v713, %v709
        %v826 = vpack.c.b16 %v714, %v710
        %v827 = vpack.c.b16 %v719, %v715
        %v828 = vpack.c.b16 %v720, %v716
        %v829 = vpack.c.b16 %v721, %v717
        %v830 = vpack.c.b16 %v722, %v718
        %v831 = vpack.c.b16 %v727, %v723
        %v832 = vpack.c.b16 %v728, %v724
        %v833 = vpack.c.b16 %v729, %v725
        %v834 = vpack.c.b16 %v730, %v726
        %v835 = vpack.c.b16 %v735, %v731
        %v836 = vpack.c.b16 %v736, %v732
        %v837 = vpack.c.b16 %v737, %v733
        %v838 = vpack.c.b16 %v738, %v734
        %v839 = vpack.c.b16 %v743, %v739
        %v840 = vpack.c.b16 %v744, %v740
        %v841 = vpack.c.b16 %v745, %v741
        %v842 = vpack.c.b16 %v746, %v742
        %v843 = vpack.c.b16 %v751, %v747
        %v844 = vpack.c.b16 %v752, %v748
        %v845 = vpack.c.b16 %v753, %v749
        %v846 = vpack.c.b16 %v754, %v750
        %v847 = vpack.c.b16 %v759, %v755
        %v848 = vpack.c.b16 %v760, %v756
        %v849 = vpack.c.b16 %v761, %v757
        %v850 = vpack.c.b16 %v762, %v758
        %v851 = vpack.c.b16 %v767, %v763
        %v852 = vpack.c.b16 %v768, %v764
        %v853 = vpack.c.b16 %v769, %v765
        %v854 = vpack.c.b16 %v770, %v766
        %v855 = vpack.c.b16 %v775, %v771
        %v856 = vpack.c.b16 %v776, %v772
        %v857 = vpack.c.b16 %v777, %v773
        %v858 = vpack.c.b16 %v778, %v774
        %v859 = vpack.c.b16 %v783, %v779
        %v860 = vpack.c.b16 %v784, %v780
        %v861 = vpack.c.b16 %v785, %v781
        %v862 = vpack.c.b16 %v786, %v782
        %v863 = vpack.c.b16 %v791, %v787
        %v864 = vpack.c.b16 %v792, %v788
        %v865 = vpack.c.b16 %v793, %v789
        %v866 = vpack.c.b16 %v794, %v790
        %v867 = vpack.c.b16 %v799, %v795
        %v868 = vpack.c.b16 %v800, %v796
        %v869 = vpack.c.b16 %v801, %v797
        %v870 = vpack.c.b16 %v802, %v798
        %v871 = vpack.c.b16 %v807, %v803
        %v872 = vpack.c.b16 %v808, %v804
        %v873 = vpack.c.b16 %v809, %v805
        %v874 = vpack.c.b16 %v810, %v806
        %v940 = vlaneseq
        %v941 = vshrl.u32 %v940, 7
        %v942 = vsub.s32 0, %v941
        %v943 = vrot.slane %v434, %v942
        %v944 = vlaneseq
        %v945 = vshrl.u32 %v944, 7
        %v946 = vsub.s32 1, %v945
        %v947 = vrot.slane %v434, %v946
        %v948 = vlaneseq
        %v949 = vshrl.u32 %v948, 7
        %v950 = vsub.s32 2, %v949
        %v951 = vrot.slane %v434, %v950
        %v952 = vlaneseq
        %v953 = vshrl.u32 %v952, 7
        %v954 = vsub.s32 3, %v953
        %v955 = vrot.slane %v434, %v954
        %960 = vmatprep.subr.bf16.mxu0 %v840
        %961 = vmatpush1.bf16.msra.mxu0 %v839
        %962 = vmatprep.subr.bf16.mxu0 %v836
        %963 = vmatpush1.bf16.msra.mxu0 %v835
        %964 = vmatprep.subr.bf16.mxu0 %v832
        %965 = vmatpush1.bf16.msra.mxu0 %v831
        %966 = vmatprep.subr.bf16.mxu0 %v828
        %967 = vmatpush1.bf16.msra.mxu0 %v827
        %968 = vmatprep.subr.bf16.mxu0 %v824
        %969 = vmatpush1.bf16.msra.mxu0 %v823
        %970 = vmatprep.subr.bf16.mxu0 %v820
        %971 = vmatpush1.bf16.msra.mxu0 %v819
        %972 = vmatprep.subr.bf16.mxu0 %v816
        %973 = vmatpush1.bf16.msra.mxu0 %v815
        %974 = vmatprep.subr.bf16.mxu0 %v812
        %975 = vmatpush1.bf16.msra.mxu0 %v811
        %976 = vmatprep.subr.bf16.mxu0 %v872
        %977 = vmatpush2.bf16.msra.mxu0 %v871
        %978 = vmatprep.subr.bf16.mxu0 %v868
        %979 = vmatpush2.bf16.msra.mxu0 %v867
        %980 = vmatprep.subr.bf16.mxu0 %v864
        %981 = vmatpush2.bf16.msra.mxu0 %v863
        %982 = vmatprep.subr.bf16.mxu0 %v860
        %983 = vmatpush2.bf16.msra.mxu0 %v859
        %984 = vmatprep.subr.bf16.mxu0 %v856
        %985 = vmatpush2.bf16.msra.mxu0 %v855
        %986 = vmatprep.subr.bf16.mxu0 %v852
        %987 = vmatpush2.bf16.msra.mxu0 %v851
        %988 = vmatprep.subr.bf16.mxu0 %v848
        %989 = vmatpush2.bf16.msra.mxu0 %v847
        %990 = vmatprep.subr.bf16.mxu0 %v844
        %991 = vmatpush2.bf16.msra.mxu0 %v843
        %992 = vmatprep.mubr.bf16.mxu0 %v618
        %993 = vmatmul.mubr.bf16.gmra.mxu0 %v617
        %v994 = vpop.f32.mrf.mxu0
        %v995 = vadd.f32 %v943, %v994
        %v996 = vpop.f32.mrf.mxu0
        %v997 = vadd.f32 %v947, %v996
        %v998 = vpop.f32.mrf.mxu0
        %v999 = vpop.f32.mrf.mxu0
        %1000 = vdwg.mxu0
        %1001 = vmatprep.subr.bf16.mxu0 %v842
        %1002 = vmatpush1.bf16.msra.mxu0 %v841
        %1003 = vmatprep.subr.bf16.mxu0 %v838
        %1004 = vmatpush1.bf16.msra.mxu0 %v837
        %1005 = vmatprep.subr.bf16.mxu0 %v834
        %1006 = vmatpush1.bf16.msra.mxu0 %v833
        %1007 = vmatprep.subr.bf16.mxu0 %v830
        %1008 = vmatpush1.bf16.msra.mxu0 %v829
        %1009 = vmatprep.subr.bf16.mxu0 %v826
        %1010 = vmatpush1.bf16.msra.mxu0 %v825
        %1011 = vmatprep.subr.bf16.mxu0 %v822
        %1012 = vmatpush1.bf16.msra.mxu0 %v821
        %1013 = vmatprep.subr.bf16.mxu0 %v818
        %1014 = vmatpush1.bf16.msra.mxu0 %v817
        %1015 = vmatprep.subr.bf16.mxu0 %v814
        %1016 = vmatpush1.bf16.msra.mxu0 %v813
        %1017 = vmatprep.subr.bf16.mxu0 %v874
        %1018 = vmatpush2.bf16.msra.mxu0 %v873
        %1019 = vmatprep.subr.bf16.mxu0 %v870
        %1020 = vmatpush2.bf16.msra.mxu0 %v869
        %1021 = vmatprep.subr.bf16.mxu0 %v866
        %1022 = vmatpush2.bf16.msra.mxu0 %v865
        %1023 = vmatprep.subr.bf16.mxu0 %v862
        %1024 = vmatpush2.bf16.msra.mxu0 %v861
        %1025 = vmatprep.subr.bf16.mxu0 %v858
        %1026 = vmatpush2.bf16.msra.mxu0 %v857
        %1027 = vmatprep.subr.bf16.mxu0 %v854
        %1028 = vmatpush2.bf16.msra.mxu0 %v853
        %1029 = vmatprep.subr.bf16.mxu0 %v850
        %1030 = vmatpush2.bf16.msra.mxu0 %v849
        %1031 = vmatprep.subr.bf16.mxu0 %v846
        %1032 = vmatpush2.bf16.msra.mxu0 %v845
        %1033 = vmatprep.mubr.bf16.mxu0 %v618
        %1034 = vmatmul.mubr.bf16.gmra.mxu0 %v617
        %v1035 = vpop.f32.mrf.mxu0
        %v1036 = vadd.f32 %v951, %v1035
        %v1037 = vpop.f32.mrf.mxu0
        %v1038 = vadd.f32 %v955, %v1037
        %v1039 = vpop.f32.mrf.mxu0
        %v1040 = vpop.f32.mrf.mxu0
        %1041 = vdwg.mxu0
        %v1042 = vxor.u32 %v995, 2147483648
        %v1043 = vmul.f32 %v1042, 1.442695
        %v1044 = vpow.pop %v1043
        %v1045 = vadd.f32 %v1044, 1.0
        %v1046 = vrcp.pop %v1045
        %v1047 = vmul.f32 1.0, %v1046
        %v1048 = vxor.u32 %v997, 2147483648
        %v1049 = vmul.f32 %v1048, 1.442695
        %v1050 = vpow.pop %v1049
        %v1051 = vadd.f32 %v1050, 1.0
        %v1052 = vrcp.pop %v1051
        %v1053 = vmul.f32 1.0, %v1052
        %v1054 = vtanh.pop %v1036
        %v1055 = vxor.u32 %v1038, 2147483648
        %v1056 = vmul.f32 %v1055, 1.442695
        %v1057 = vpow.pop %v1056
        %v1058 = vadd.f32 %v1057, 1.0
        %v1059 = vrcp.pop %v1058
        %v1060 = vmul.f32 1.0, %v1059
        %v1061 = vmul.f32 %v1053, %v285
        %v1062 = vmul.f32 %v1047, %v1054
        %v1063 = vadd.f32 %v1061, %v1062
        %v1064 = vtanh.pop %v1063
        %v1065 = vmul.f32 %v1060, %v1064
        %v1066 = vpack.c.bf16 %v527, %v527
        %v1067 = vpack.c.bf16 %v1065, %v1065
        %v1100 = vunpack.c.l.b16 %v400
        %v1101 = vunpack.c.l.b16 %v401
        %v1102 = vunpack.c.l.b16 %v402
        %v1103 = vunpack.c.l.b16 %v403
        %v1104 = vunpack.c.l.b16 %v404
        %v1105 = vunpack.c.l.b16 %v405
        %v1106 = vunpack.c.l.b16 %v406
        %v1107 = vunpack.c.l.b16 %v407
        %v1108 = vunpack.c.l.b16 %v408
        %v1109 = vunpack.c.l.b16 %v409
        %v1110 = vunpack.c.l.b16 %v410
        %v1111 = vunpack.c.l.b16 %v411
        %v1112 = vunpack.c.l.b16 %v412
        %v1113 = vunpack.c.l.b16 %v413
        %v1114 = vunpack.c.l.b16 %v414
        %v1115 = vunpack.c.l.b16 %v415
        %v1116 = vunpack.c.l.b16 %v416
        %v1117 = vunpack.c.l.b16 %v417
        %v1118 = vunpack.c.l.b16 %v418
        %v1119 = vunpack.c.l.b16 %v419
        %v1120 = vunpack.c.l.b16 %v420
        %v1121 = vunpack.c.l.b16 %v421
        %v1122 = vunpack.c.l.b16 %v422
        %v1123 = vunpack.c.l.b16 %v423
        %v1124 = vunpack.c.l.b16 %v424
        %v1125 = vunpack.c.l.b16 %v425
        %v1126 = vunpack.c.l.b16 %v426
        %v1127 = vunpack.c.l.b16 %v427
        %v1128 = vunpack.c.l.b16 %v428
        %v1129 = vunpack.c.l.b16 %v429
        %v1130 = vunpack.c.l.b16 %v430
        %v1131 = vunpack.c.l.b16 %v431
        %v1132 = vpack.c.b16 %v1101, %v1100
        %v1133 = vpack.c.b16 %v1103, %v1102
        %v1134 = vpack.c.b16 %v1105, %v1104
        %v1135 = vpack.c.b16 %v1107, %v1106
        %v1136 = vpack.c.b16 %v1109, %v1108
        %v1137 = vpack.c.b16 %v1111, %v1110
        %v1138 = vpack.c.b16 %v1113, %v1112
        %v1139 = vpack.c.b16 %v1115, %v1114
        %v1140 = vpack.c.b16 %v1117, %v1116
        %v1141 = vpack.c.b16 %v1119, %v1118
        %v1142 = vpack.c.b16 %v1121, %v1120
        %v1143 = vpack.c.b16 %v1123, %v1122
        %v1144 = vpack.c.b16 %v1125, %v1124
        %v1145 = vpack.c.b16 %v1127, %v1126
        %v1146 = vpack.c.b16 %v1129, %v1128
        %v1147 = vpack.c.b16 %v1131, %v1130
        %1164 = vmatprep.subr.bf16.mxu0 0
        %1165 = vmatpush1.bf16.msra.mxu0 %v1139
        %1166 = vmatprep.subr.bf16.mxu0 0
        %1167 = vmatpush1.bf16.msra.mxu0 %v1138
        %1168 = vmatprep.subr.bf16.mxu0 0
        %1169 = vmatpush1.bf16.msra.mxu0 %v1137
        %1170 = vmatprep.subr.bf16.mxu0 0
        %1171 = vmatpush1.bf16.msra.mxu0 %v1136
        %1172 = vmatprep.subr.bf16.mxu0 0
        %1173 = vmatpush1.bf16.msra.mxu0 %v1135
        %1174 = vmatprep.subr.bf16.mxu0 0
        %1175 = vmatpush1.bf16.msra.mxu0 %v1134
        %1176 = vmatprep.subr.bf16.mxu0 0
        %1177 = vmatpush1.bf16.msra.mxu0 %v1133
        %1178 = vmatprep.subr.bf16.mxu0 0
        %1179 = vmatpush1.bf16.msra.mxu0 %v1132
        %1180 = vmatprep.subr.bf16.mxu0 0
        %1181 = vmatpush2.bf16.msra.mxu0 %v1147
        %1182 = vmatprep.subr.bf16.mxu0 0
        %1183 = vmatpush2.bf16.msra.mxu0 %v1146
        %1184 = vmatprep.subr.bf16.mxu0 0
        %1185 = vmatpush2.bf16.msra.mxu0 %v1145
        %1186 = vmatprep.subr.bf16.mxu0 0
        %1187 = vmatpush2.bf16.msra.mxu0 %v1144
        %1188 = vmatprep.subr.bf16.mxu0 0
        %1189 = vmatpush2.bf16.msra.mxu0 %v1143
        %1190 = vmatprep.subr.bf16.mxu0 0
        %1191 = vmatpush2.bf16.msra.mxu0 %v1142
        %1192 = vmatprep.subr.bf16.mxu0 0
        %1193 = vmatpush2.bf16.msra.mxu0 %v1141
        %1194 = vmatprep.subr.bf16.mxu0 0
        %1195 = vmatpush2.bf16.msra.mxu0 %v1140
        %1196 = vmatprep.mubr.bf16.mxu0 %v1067
        %1197 = vmatmul.mubr.bf16.gmra.mxu0 %v1066
        %v1198 = vpop.f32.mrf.mxu0
        %v1199 = vadd.f32 %v435, %v1198
        %v1200 = vpop.f32.mrf.mxu0
        %v1201 = vpop.f32.mrf.mxu0
        %v1202 = vpop.f32.mrf.mxu0
        %1203 = vdwg.mxu0
        %v1204 = vmax.f32 %v1199, 0.0
        %v1205 = vpack.c.bf16 %v1204, %v1204
        %v1222 = vunpack.c.l.b16 %v320
        %v1223 = vunpack.c.l.b16 %v321
        %v1224 = vunpack.c.l.b16 %v322
        %v1225 = vunpack.c.l.b16 %v323
        %v1226 = vunpack.c.l.b16 %v324
        %v1227 = vunpack.c.l.b16 %v325
        %v1228 = vunpack.c.l.b16 %v326
        %v1229 = vunpack.c.l.b16 %v327
        %v1230 = vunpack.c.l.b16 %v328
        %v1231 = vunpack.c.l.b16 %v329
        %v1232 = vunpack.c.l.b16 %v330
        %v1233 = vunpack.c.l.b16 %v331
        %v1234 = vunpack.c.l.b16 %v332
        %v1235 = vunpack.c.l.b16 %v333
        %v1236 = vunpack.c.l.b16 %v334
        %v1237 = vunpack.c.l.b16 %v335
        %v1238 = vpack.c.b16 %v1223, %v1222
        %v1239 = vpack.c.b16 %v1225, %v1224
        %v1240 = vpack.c.b16 %v1227, %v1226
        %v1241 = vpack.c.b16 %v1229, %v1228
        %v1242 = vpack.c.b16 %v1231, %v1230
        %v1243 = vpack.c.b16 %v1233, %v1232
        %v1244 = vpack.c.b16 %v1235, %v1234
        %v1245 = vpack.c.b16 %v1237, %v1236
        %1254 = vmatprep.subr.bf16.mxu0 0
        %1255 = vmatpush1.bf16.msra.mxu0 %v1245
        %1256 = vmatprep.subr.bf16.mxu0 0
        %1257 = vmatpush1.bf16.msra.mxu0 %v1244
        %1258 = vmatprep.subr.bf16.mxu0 0
        %1259 = vmatpush1.bf16.msra.mxu0 %v1243
        %1260 = vmatprep.subr.bf16.mxu0 0
        %1261 = vmatpush1.bf16.msra.mxu0 %v1242
        %1262 = vmatprep.subr.bf16.mxu0 0
        %1263 = vmatpush1.bf16.msra.mxu0 %v1241
        %1264 = vmatprep.subr.bf16.mxu0 0
        %1265 = vmatpush1.bf16.msra.mxu0 %v1240
        %1266 = vmatprep.subr.bf16.mxu0 0
        %1267 = vmatpush1.bf16.msra.mxu0 %v1239
        %1268 = vmatprep.subr.bf16.mxu0 0
        %1269 = vmatpush1.bf16.msra.mxu0 %v1238
        %1270 = vmatprep.subr.bf16.mxu0 0
        %1271 = vmatpush2.bf16.msra.mxu0 0
        %1272 = vmatprep.subr.bf16.mxu0 0
        %1273 = vmatpush2.bf16.msra.mxu0 0
        %1274 = vmatprep.subr.bf16.mxu0 0
        %1275 = vmatpush2.bf16.msra.mxu0 0
        %1276 = vmatprep.subr.bf16.mxu0 0
        %1277 = vmatpush2.bf16.msra.mxu0 0
        %1278 = vmatprep.subr.bf16.mxu0 0
        %1279 = vmatpush2.bf16.msra.mxu0 0
        %1280 = vmatprep.subr.bf16.mxu0 0
        %1281 = vmatpush2.bf16.msra.mxu0 0
        %1282 = vmatprep.subr.bf16.mxu0 0
        %1283 = vmatpush2.bf16.msra.mxu0 0
        %1284 = vmatprep.subr.bf16.mxu0 0
        %1285 = vmatpush2.bf16.msra.mxu0 0
        %1286 = vmatprep.mubr.bf16.mxu0 0
        %1287 = vmatmul.mubr.bf16.gmra.mxu0 %v1205
        %v1288 = vpop.f32.mrf.mxu0
        %v1289 = vadd.f32 %v436, %v1288
        %v1290 = vpop.f32.mrf.mxu0
        %v1291 = vpop.f32.mrf.mxu0
        %v1292 = vpop.f32.mrf.mxu0
        %1293 = vdwg.mxu0
        %v1294 = vmax.f32 %v1289, 0.0
        %v1295 = vmul.f32 %v1294, %v437
        %vm1296 = vcmask 1040384
        %v1297 = vsel %vm1296, %v1295, 0.0
        %1298 = vadd.xlane.f32.xlu0 %v1297
        %v1299 = vpop.xlane.xlu0 %1298
        %v1300 = vadd.f32 %v1299, %v438
        %1301 = vst [vmem:[%s272] sm:$0x1] %v1300
        %v1302 = vlaneseq
        %vm1303 = vcmp.ge.s32.totalorder %v1302, 0
        %vm1304 = vcmp.lt.s32.totalorder %v1302, 128
        %vm1305 = vmand %vm1303, %vm1304
        %1306 = vst.msk [vmem:[%s6] sm:$0x1] %vm1305, %v1065
        %1307 = vst.msk [vmem:[%s6 + $0x1] sm:$0x1] %vm1305, %v1063
        %p1308 = scmp.lt.s32.totalorder %s20, 7
        %s1309 = scalar_select %p1308, %s20, 7
        %s1310 = scalar_lea.vmem %s5, %s1309
        // Predicated region
        $region53: #{critic_rollout.1} parent=39 // pred_check
          %p1311 = pneg %p148
        $region54: #{critic_rollout.1} parent=39 // pred_check_branch
          %1313 = sbr.rel (%p1311) target = $region56
        $region55: #{critic_rollout.1} parent=39 // pred_region
          _
        $region56: #{critic_rollout.1} parent=39 // pred_fallthru
          _
        // Predicated region
        $region57: #{critic_rollout.1} parent=39 // pred_check
          %p1314 = pneg %p169
        $region58: #{critic_rollout.1} parent=39 // pred_check_branch
          %1316 = sbr.rel (%p1314) target = $region60
        $region59: #{critic_rollout.1} parent=39 // pred_region
          _
        $region60: #{critic_rollout.1} parent=39 // pred_fallthru
          _
        // Predicated region
        $region61: #{critic_rollout.1} parent=39 // pred_check
          %p1317 = pneg %p169
        $region62: #{critic_rollout.1} parent=39 // pred_check_branch
          %1319 = sbr.rel (%p1317) target = $region64
        $region63: #{critic_rollout.1} parent=39 // pred_region
          _
        $region64: #{critic_rollout.1} parent=39 // pred_fallthru
          _
      $region40: #{critic_rollout.1} parent=5 // pred_fallthru
        _
      %p1320 = scmp.le.s32.totalorder 2, %s15
      // Predicated region
      $region65: #{critic_rollout.1} parent=5 // pred_check
        %p1321 = pneg %p1320
      $region66: #{critic_rollout.1} parent=5 // pred_check_branch
        %1323 = sbr.rel (%p1321) target = $region68
      $region67: #{critic_rollout.1} parent=5 // pred_region
        %s1324 = ssub.s32 %s15, 2
        // Predicated region
        $region69: #{critic_rollout.1} parent=67 // pred_check
          %p1325 = pneg %p154
        $region70: #{critic_rollout.1} parent=67 // pred_check_branch
          %1327 = sbr.rel (%p1325) target = $region72
        $region71: #{critic_rollout.1} parent=67 // pred_region
          %p1328 = scmp.lt.s32.totalorder %s21, 7
          %s1329 = scalar_select %p1328, %s21, 7
          %s1330 = scalar_lea.vmem %s5, %s1329
        $region72: #{critic_rollout.1} parent=67 // pred_fallthru
          _
      $region68: #{critic_rollout.1} parent=5 // pred_fallthru
        _
    $region6: #{critic_rollout.1} parent=1 // loop_footer
      %s19 = sadd.s32 1, %s15
    $region7: #{critic_rollout.1} parent=1 // loop_footer_branch
      %14 = sbr.rel target = $region3
    $region8: #{critic_rollout.1} parent=1 // loop_exit
      _
    %1331 = vsyncpa [#allocation3], 1
    %s1332 = scalar_lea.sflag [#allocation3], 1
    %1333 = vsyncpa %s1332, 1
    %1334 = vsyncpa [#allocation5], 1

</llo_original>
